<compile_context>
chip_gen: v5e
topology: v5e:2x2
jax: 0.10.0
libtpu: 0.0.40
codegen_flags: <defaults>
</compile_context>

<pallas_src>
import functools

import jax
import jax.numpy as jnp
from jax.experimental import pallas as pl
from jax.experimental.pallas import tpu as pltpu


CONFIG = {
    "input_channels": 1,
    "tcn_channels": [16, 16],
    "tcn_dilations": [1, 2],
    "tcn_kernel_sizes": [3, 3],
    "tcn_dropout": 0.2,                # identity at inference
    "mass_embedding_dim": 8,
    "ce_embedding_dim": 8,
    "add_embedding_dim": 8,
    "num_add": 4,
    "embedding_dim": 32,
    "output_dim": 12,
    "formula_decoder_layers": [32],
    "mass_decoder_layers": [32],
    "atomnum_decoder_layers": [32],
    "hcnum_decoder_layers": [32],
}


# ------------------------------ fused kernel ---------------------------------


def _ms2fnet_kernel(*refs, plan, batch, n_dec_layers):
    """Fused MS2FNet_tcn forward pass (single invocation, no grid).

    Ref order:
      inputs : x_pad (B, L0+pad0, C0) causally pre-padded in the wrapper,
               env (B, 2), add_onehot (B, num_add+1),
               per TCN level: w1f, b1, w2f(+fused 1x1 residual rows), b2,
               per level folded fc1 pooled weight, fc1_env_w, fc1_add_w, fc1_b,
               fc2_w, fc2_b, packed decoder (w, b) * n_dec_layers
      outputs: encoded (B, E), dec (B, 128-padded)
      scratch: per level: [x_pad (levels > 0)], h_pad
    """
    n_lvl = len(plan)
    idx = 0
    x_pad0_ref, env_ref, add_oh_ref = refs[idx:idx + 3]; idx += 3
    level_wrefs = []
    for _ in plan:
        level_wrefs.append(refs[idx:idx + 4]); idx += 4
    fc1_pooled_wrefs = refs[idx:idx + n_lvl]; idx += n_lvl
    (fc1_env_w_ref, fc1_add_w_ref, fc1_b_ref,
     fc2_w_ref, fc2_b_ref) = refs[idx:idx + 5]; idx += 5
    dec_refs = refs[idx:idx + 2 * n_dec_layers]; idx += 2 * n_dec_layers
    encoded_ref, dec_ref = refs[idx:idx + 2]; idx += 2
    scratch = refs[idx:]

    def mxdot(a, w_ref):
        # bf16 MXU operands, f32 accumulation; elementwise math stays f32.
        return jnp.dot(a.astype(jnp.bfloat16), w_ref[...],
                       preferred_element_type=jnp.float32)

    def im2col(pad3, k, d, L):
        # (B, L+pad, C) causally padded activations -> (B*L, k*C) slab for the whole
        # batch at once.  Column [j*C + c] = kernel tap j, input channel c (matches the
        # pre-flattened weight packing).  This IS Conv1d(padding)+Chomp1d.
        c = pad3.shape[2]
        taps = [pad3[:, j * d:j * d + L, :] for j in range(k)]
        slab = jnp.concatenate(taps, axis=-1) if k > 1 else taps[0]
        return slab.reshape(batch * L, k * c)

    # ----------------------------------- TCN ----------------------------------
    sidx = 0
    pooled = []
    x_in3 = None                                 # (B, L, C_in) produced by prev level
    for i, p in enumerate(plan):
        k, d, L, pad = p["k"], p["d"], p["L"], p["pad"]
        c_in, c_out = p["c_in"], p["c_out"]
        w1_ref, b1_ref, w2_ref, b2_ref = level_wrefs[i]

        if i == 0:
            pad_in = x_pad0_ref[...]             # left-pad already done in the wrapper
        else:
            xs = scratch[sidx]; sidx += 1        # scratch is NOT pre-zeroed:
            xs[:, :pad, :] = jnp.zeros((batch, pad, c_in), jnp.float32)   # one fill
            xs[:, pad:, :] = x_in3
            pad_in = xs[...]
        x_flat = pad_in[:, pad:, :].reshape(batch * L, c_in)   # residual input

        # conv1 (causal) + ReLU: one batched im2col matmul.
        h = jnp.maximum(mxdot(im2col(pad_in, k, d, L), w1_ref) + b1_ref[...], 0.0)

        # conv2 (causal); the 1x1 residual downsample is fused into the same matmul.
        hs = scratch[sidx]; sidx += 1
        hs[:, :pad, :] = jnp.zeros((batch, pad, c_out), jnp.float32)
        hs[:, pad:, :] = h.reshape(batch, L, c_out)
        slab2 = im2col(hs[...], k, d, L)
        if p["has_ds"]:
            slab2 = jnp.concatenate([slab2, x_flat], axis=-1)   # + residual columns
            y = jnp.maximum(mxdot(slab2, w2_ref) + b2_ref[...], 0.0)
        else:
            y = jnp.maximum(mxdot(slab2, w2_ref) + b2_ref[...] + x_flat, 0.0)

        y3 = y.reshape(batch, L, c_out)
        pooled.append(jnp.mean(y3, axis=1))                     # AdaptiveAvgPool1d(1)

        if not p["last"]:
            # MaxPool1d(kernel=2, stride=2): pair-max over adjacent time steps.
            m = jnp.max(y.reshape(batch * (L // 2), 2, c_out), axis=1)
            x_in3 = m.reshape(batch, L // 2, c_out)

    # -------------------- embeddings folded into fc1 + fc2 --------------------
    acc = mxdot(env_ref[...], fc1_env_w_ref) + mxdot(add_oh_ref[...], fc1_add_w_ref)
    for i in range(n_lvl):
        acc = acc + mxdot(pooled[i], fc1_pooled_wrefs[i])
    h = jnp.maximum(acc + fc1_b_ref[...], 0.0)
    encoded = mxdot(h, fc2_w_ref) + fc2_b_ref[...]
    encoded_ref[...] = encoded

    # -------------------------- packed decoder heads --------------------------
    z = encoded
    for li in range(n_dec_layers):
        z = mxdot(z, dec_refs[2 * li]) + dec_refs[2 * li + 1][...]
        if li < n_dec_layers - 1:
            z = jnp.where(z >= 0.0, z, 0.2 * z)   # LeakyReLU(0.2) between layers only
    dec_ref[...] = z                              # lane-dense (128-padded) store


# ------------------------------- wrappers -------------------------------------


def _make_plan(cfg, c0, l0):
    plan = []
    c_in, L = c0, l0
    n = len(cfg["tcn_channels"])
    for i in range(n):
        c_out = cfg["tcn_channels"][i]
        k = cfg["tcn_kernel_sizes"][i]
        d = cfg["tcn_dilations"][i]
        plan.append(dict(c_in=c_in, c_out=c_out, k=k, d=d, pad=(k - 1) * d, L=L,
                         has_ds=(c_in != c_out), last=(i == n - 1)))
        c_in = c_out
        if i < n - 1:
            assert L % 2 == 0, "MaxPool1d(2,2) requires even length"
            L = L // 2                       # MaxPool1d(2, 2) between blocks
    return plan


def ms2fnet_tcn_forward(params, x, env, cfg):
    # x: (B, L) or (B, L, C); env: (B, 3) with [mass, ce, adduct_index]
    if x.ndim == 2:
        x = x[:, :, None]                                     # (B, L, 1)
    B, L0, C0 = x.shape
    plan = _make_plan(cfg, C0, L0)

    # Chomp1d semantics: causal left-pad of the first level's input in the wrapper;
    # it fuses into the surrounding XLA program and rides the same HBM->VMEM DMA.
    pad0 = plan[0]["pad"]
    x_pad = jnp.pad(x.astype(jnp.float32), ((0, 0), (pad0, 0), (0, 0)))

    env_cont = env[:, 0:2].astype(jnp.float32)                # [mass, ce]
    add_oh = jax.nn.one_hot(env[:, 2].astype(jnp.int32),
                            cfg["num_add"] + 1, dtype=jnp.float32)

    inputs = [x_pad, env_cont, add_oh]
    for blk in params["tcn"]:
        inputs += [blk["w1f"], blk["b1"], blk["w2f"], blk["b2"]]
    inputs += list(params["fc1_pooled_w"])
    inputs += [params["fc1_env_w"], params["fc1_add_w"], params["fc1_b"],
               params["fc2_w"], params["fc2_b"]]
    for (w, b) in params["dec_packed"]:
        inputs += [w, b]

    # Padded scratch only for activations produced inside the kernel.
    scratch_shapes = []
    for i, p in enumerate(plan):
        if i > 0:
            scratch_shapes.append(
                pltpu.VMEM((B, p["L"] + p["pad"], p["c_in"]), jnp.float32))
        scratch_shapes.append(
            pltpu.VMEM((B, p["L"] + p["pad"], p["c_out"]), jnp.float32))

    n_dec = len(params["dec_packed"])
    dec_cols = params["dec_packed"][-1][0].shape[1]           # padded to mult of 128
    e = cfg["embedding_dim"]

    kernel = functools.partial(_ms2fnet_kernel, plan=plan, batch=B,
                               n_dec_layers=n_dec)
    encoded, dec = pl.pallas_call(
        kernel,
        out_shape=(jax.ShapeDtypeStruct((B, e), jnp.float32),
                   jax.ShapeDtypeStruct((B, dec_cols), jnp.float32)),
        scratch_shapes=scratch_shapes,
    )(*inputs)

    od = cfg["output_dim"]
    formula = dec[:, 0:od]
    mass = dec[:, od]
    atomnum = dec[:, od + 1]
    hcnum = dec[:, od + 2]
    return encoded, formula, mass, atomnum, hcnum


# ------------------------------ parameters ------------------------------------


def init_params(key, cfg):
    keys = iter(jax.random.split(key, 128))

    def nrm(shape, scale=0.2):
        return scale * jax.random.normal(next(keys), shape, dtype=jnp.float32)

    params = {}

    # TCN blocks; conv weights pre-flattened (row index = tap*C_in + channel) so each
    # causal conv (Conv1d + Chomp1d) is ONE im2col matmul.  The 1x1 residual downsample
    # (when C_in != C_out) is stacked under conv2's weight -> `o + res` in one matmul.
    tcn = []
    c_prev = cfg["input_channels"]
    for i, c_out in enumerate(cfg["tcn_channels"]):
        k = cfg["tcn_kernel_sizes"][i]
        w1f = nrm((k * c_prev, c_out))
        b1 = nrm((1, c_out), 0.05)
        w2f = nrm((k * c_out, c_out))
        b2 = nrm((1, c_out), 0.05)
        if c_prev != c_out:
            wds = nrm((c_prev, c_out))
            bds = nrm((1, c_out), 0.05)
            w2f = jnp.concatenate([w2f, wds], axis=0)     # fused residual rows
            b2 = b2 + bds
        tcn.append({"w1f": w1f.astype(jnp.bfloat16), "b1": b1,
                    "w2f": w2f.astype(jnp.bfloat16), "b2": b2})
        c_prev = c_out
    params["tcn"] = tcn

    # mass/ce Linear(1,8) embeddings + adduct embedding, folded exactly into fc1
    # (no nonlinearity between the embeddings and fc1).
    dm, dc, da = (cfg["mass_embedding_dim"], cfg["ce_embedding_dim"],
                  cfg["add_embedding_dim"])
    w_m, b_m = nrm((1, dm)), nrm((1, dm), 0.05)
    w_ce, b_ce = nrm((1, dc)), nrm((1, dc), 0.05)
    env_w = jnp.zeros((2, dm + dc), jnp.float32)
    env_w = env_w.at[0, :dm].set(w_m[0]).at[1, dm:].set(w_ce[0])
    env_b = jnp.concatenate([b_m, b_ce], axis=1)
    emb_add = nrm((cfg["num_add"] + 1, da), 0.01)

    env_dim = dm + dc + da
    pooled_dim = sum(cfg["tcn_channels"])
    fc_in = pooled_dim + env_dim
    e = cfg["embedding_dim"]
    fc1_w, fc1_b = nrm((fc_in, e)), nrm((1, e), 0.05)
    fc2_w, fc2_b = nrm((e, e)), nrm((1, e), 0.05)

    fc1_pooled_w = []
    off = 0
    for c in cfg["tcn_channels"]:
        fc1_pooled_w.append(fc1_w[off:off + c, :].astype(jnp.bfloat16))
        off += c
    w_env_rows = fc1_w[off:off + dm + dc, :]
    w_add_rows = fc1_w[off + dm + dc:off + env_dim, :]
    params["fc1_pooled_w"] = fc1_pooled_w
    params["fc1_env_w"] = (env_w @ w_env_rows).astype(jnp.bfloat16)    # (2, E)
    params["fc1_add_w"] = (emb_add @ w_add_rows).astype(jnp.bfloat16)  # (num_add+1, E)
    params["fc1_b"] = fc1_b + env_b @ w_env_rows                       # (1, E), f32
    params["fc2_w"] = fc2_w.astype(jnp.bfloat16)
    params["fc2_b"] = fc2_b

    # Four decoder heads (formula/mass/atomnum/hcnum), Linear(+LeakyReLU between) stacks,
    # packed lane-dense: layer 0 shares `encoded` -> horizontal concat (E, 128); the
    # final layer is block-diagonal and zero-padded to a multiple of 128 output lanes so
    # the kernel's last store is unmasked; the wrapper slices the valid columns.
    heads = []
    for name in ["formula", "mass", "atomnum", "hcnum"]:
        layers = []
        in_dim = e
        for d in cfg[f"{name}_decoder_layers"]:
            layers.append((nrm((in_dim, d)), nrm((1, d), 0.05)))
            in_dim = d
        out_dim = cfg["output_dim"] if name == "formula" else 1
        layers.append((nrm((in_dim, out_dim)), nrm((1, out_dim), 0.05)))
        heads.append(layers)

    depths = {len(h) for h in heads}
    assert len(depths) == 1, "packed decoder heads require equal depth"
    n_layers = depths.pop()
    packed = [(jnp.concatenate([h[0][0] for h in heads], axis=1),
               jnp.concatenate([h[0][1] for h in heads], axis=1))]
    for li in range(1, n_layers):
        ws = [h[li][0] for h in heads]
        bs = [h[li][1] for h in heads]
        rows = sum(w.shape[0] for w in ws)
        cols = sum(w.shape[1] for w in ws)
        pad_cols = (-(-cols // 128) * 128) if li == n_layers - 1 else cols
        big = jnp.zeros((rows, pad_cols), jnp.float32)
        bias = jnp.zeros((1, pad_cols), jnp.float32)
        ro = co = 0
        for w, b in zip(ws, bs):
            big = big.at[ro:ro + w.shape[0], co:co + w.shape[1]].set(w)
            bias = bias.at[:, co:co + w.shape[1]].set(b)
            ro += w.shape[0]
            co += w.shape[1]
        packed.append((big, bias))
    params["dec_packed"] = [(w.astype(jnp.bfloat16), b) for (w, b) in packed]
    return params


# --------------------------------- main ----------------------------------------


if __name__ == "__main__":
    cfg = CONFIG
    key = jax.random.PRNGKey(0)
    kx, kenv, kp = jax.random.split(key, 3)

    B, L = 2, 16
    x = jax.random.normal(kx, (B, L), dtype=jnp.float32)
    env_cont = jax.random.uniform(kenv, (B, 2), dtype=jnp.float32)   # mass, ce
    env_add = jnp.array([[1.0], [3.0]], dtype=jnp.float32)           # adduct ids
    env = jnp.concatenate([env_cont, env_add], axis=1)               # (B, 3)

    params = init_params(kp, cfg)
    forward = jax.jit(functools.partial(ms2fnet_tcn_forward, cfg=cfg))
    outs = forward(params, x, env)
    outs = jax.block_until_ready(outs)

    encoded, f, mass, atomnum, hcnum = outs
    assert encoded.shape == (B, cfg["embedding_dim"])
    assert f.shape == (B, cfg["output_dim"])
    assert mass.shape == (B,)
    assert atomnum.shape == (B,)
    assert hcnum.shape == (B,)
    print("KERNEL_OK")
</pallas_src>

<mosaic_0001>
module attributes {stable_mosaic.version = 11 : i64} {
  func.func @_ms2fnet_kernel(%arg0: memref<2x18x1xf32, #tpu.memory_space<vmem>>, %arg1: memref<2x2xf32, #tpu.memory_space<vmem>>, %arg2: memref<2x5xf32, #tpu.memory_space<vmem>>, %arg3: memref<3x16xbf16, #tpu.memory_space<vmem>>, %arg4: memref<1x16xf32, #tpu.memory_space<vmem>>, %arg5: memref<49x16xbf16, #tpu.memory_space<vmem>>, %arg6: memref<1x16xf32, #tpu.memory_space<vmem>>, %arg7: memref<48x16xbf16, #tpu.memory_space<vmem>>, %arg8: memref<1x16xf32, #tpu.memory_space<vmem>>, %arg9: memref<48x16xbf16, #tpu.memory_space<vmem>>, %arg10: memref<1x16xf32, #tpu.memory_space<vmem>>, %arg11: memref<16x32xbf16, #tpu.memory_space<vmem>>, %arg12: memref<16x32xbf16, #tpu.memory_space<vmem>>, %arg13: memref<2x32xbf16, #tpu.memory_space<vmem>>, %arg14: memref<5x32xbf16, #tpu.memory_space<vmem>>, %arg15: memref<1x32xf32, #tpu.memory_space<vmem>>, %arg16: memref<32x32xbf16, #tpu.memory_space<vmem>>, %arg17: memref<1x32xf32, #tpu.memory_space<vmem>>, %arg18: memref<32x128xbf16, #tpu.memory_space<vmem>>, %arg19: memref<1x128xf32, #tpu.memory_space<vmem>>, %arg20: memref<128x128xbf16, #tpu.memory_space<vmem>>, %arg21: memref<1x128xf32, #tpu.memory_space<vmem>>, %arg22: memref<2x32xf32, #tpu.memory_space<vmem>>, %arg23: memref<2x128xf32, #tpu.memory_space<vmem>>, %arg24: memref<2x18x16xf32, #tpu.memory_space<vmem>>, %arg25: memref<2x12x16xf32, #tpu.memory_space<vmem>>, %arg26: memref<2x12x16xf32, #tpu.memory_space<vmem>>) attributes {dimension_semantics = [], scalar_prefetch = 0 : i64, scratch_operands = 3 : i64, tpu.core_type = #tpu.core_type<tc>} {
    %c0 = arith.constant 0 : index
    %c0_0 = arith.constant 0 : index
    %c0_1 = arith.constant 0 : index
    %0 = vector.load %arg0[%c0, %c0_0, %c0_1] : memref<2x18x1xf32, #tpu.memory_space<vmem>>, vector<2x18x1xf32>
    %1 = vector.extract_strided_slice %0 {offsets = [0, 2, 0], sizes = [2, 16, 1], strides = [1, 1, 1]} : vector<2x18x1xf32> to vector<2x16x1xf32>
    %2 = vector.shape_cast %1 : vector<2x16x1xf32> to vector<32x1xf32>
    %3 = vector.extract_strided_slice %0 {offsets = [0, 0, 0], sizes = [2, 16, 1], strides = [1, 1, 1]} : vector<2x18x1xf32> to vector<2x16x1xf32>
    %4 = vector.extract_strided_slice %0 {offsets = [0, 1, 0], sizes = [2, 16, 1], strides = [1, 1, 1]} : vector<2x18x1xf32> to vector<2x16x1xf32>
    %5 = vector.extract_strided_slice %0 {offsets = [0, 2, 0], sizes = [2, 16, 1], strides = [1, 1, 1]} : vector<2x18x1xf32> to vector<2x16x1xf32>
    %6 = tpu.concatenate %3, %4, %5 in 2 : vector<2x16x1xf32>, vector<2x16x1xf32>, vector<2x16x1xf32> -> vector<2x16x3xf32>
    %7 = vector.shape_cast %6 : vector<2x16x3xf32> to vector<32x3xf32>
    %8 = arith.truncf %7 : vector<32x3xf32> to vector<32x3xbf16>
    %c0_2 = arith.constant 0 : index
    %c0_3 = arith.constant 0 : index
    %9 = vector.load %arg3[%c0_2, %c0_3] : memref<3x16xbf16, #tpu.memory_space<vmem>>, vector<3x16xbf16>
    %cst = arith.constant dense<0.000000e+00> : vector<32x16xf32>
    %10 = tpu.matmul %8, %9, %cst {dimension_numbers = #tpu.dot_dimension_numbers<[1], [0], [0], [1], [0, 0, 1, 1], [], []>} : vector<32x3xbf16>, vector<3x16xbf16>, vector<32x16xf32> -> vector<32x16xf32>
    %c0_4 = arith.constant 0 : index
    %c0_5 = arith.constant 0 : index
    %11 = vector.load %arg4[%c0_4, %c0_5] : memref<1x16xf32, #tpu.memory_space<vmem>>, vector<1x16xf32>
    %12 = vector.broadcast %11 : vector<1x16xf32> to vector<32x16xf32>
    %13 = arith.addf %10, %12 : vector<32x16xf32>
    %cst_6 = arith.constant 0.000000e+00 : f32
    %14 = vector.broadcast %cst_6 : f32 to vector<32x16xf32>
    %15 = arith.maximumf %13, %14 : vector<32x16xf32>
    %cst_7 = arith.constant 0.000000e+00 : f32
    %16 = vector.broadcast %cst_7 : f32 to vector<2x2x16xf32>
    %c0_8 = arith.constant 0 : index
    %c0_9 = arith.constant 0 : index
    %c0_10 = arith.constant 0 : index
    %17 = vector.load %arg24[%c0_8, %c0_9, %c0_10] : memref<2x18x16xf32, #tpu.memory_space<vmem>>, vector<2x2x16xf32>
    tpu.vector_store %arg24[%c0_8, %c0_9, %c0_10], %16 {strides = array<i32>} : memref<2x18x16xf32, #tpu.memory_space<vmem>>, vector<2x2x16xf32>,
    %18 = vector.shape_cast %15 : vector<32x16xf32> to vector<2x16x16xf32>
    %c0_11 = arith.constant 0 : index
    %c2 = arith.constant 2 : index
    %c0_12 = arith.constant 0 : index
    %19 = vector.load %arg24[%c0_11, %c2, %c0_12] : memref<2x18x16xf32, #tpu.memory_space<vmem>>, vector<2x16x16xf32>
    tpu.vector_store %arg24[%c0_11, %c2, %c0_12], %18 {strides = array<i32>} : memref<2x18x16xf32, #tpu.memory_space<vmem>>, vector<2x16x16xf32>,
    %c0_13 = arith.constant 0 : index
    %c0_14 = arith.constant 0 : index
    %c0_15 = arith.constant 0 : index
    %20 = vector.load %arg24[%c0_13, %c0_14, %c0_15] : memref<2x18x16xf32, #tpu.memory_space<vmem>>, vector<2x18x16xf32>
    %21 = vector.extract_strided_slice %20 {offsets = [0, 0, 0], sizes = [2, 16, 16], strides = [1, 1, 1]} : vector<2x18x16xf32> to vector<2x16x16xf32>
    %22 = vector.extract_strided_slice %20 {offsets = [0, 1, 0], sizes = [2, 16, 16], strides = [1, 1, 1]} : vector<2x18x16xf32> to vector<2x16x16xf32>
    %23 = vector.extract_strided_slice %20 {offsets = [0, 2, 0], sizes = [2, 16, 16], strides = [1, 1, 1]} : vector<2x18x16xf32> to vector<2x16x16xf32>
    %24 = tpu.concatenate %21, %22, %23 in 2 : vector<2x16x16xf32>, vector<2x16x16xf32>, vector<2x16x16xf32> -> vector<2x16x48xf32>
    %25 = vector.shape_cast %24 : vector<2x16x48xf32> to vector<32x48xf32>
    %26 = tpu.concatenate %25, %2 in 1 : vector<32x48xf32>, vector<32x1xf32> -> vector<32x49xf32>
    %27 = arith.truncf %26 : vector<32x49xf32> to vector<32x49xbf16>
    %c0_16 = arith.constant 0 : index
    %c0_17 = arith.constant 0 : index
    %28 = vector.load %arg5[%c0_16, %c0_17] : memref<49x16xbf16, #tpu.memory_space<vmem>>, vector<49x16xbf16>
    %cst_18 = arith.constant dense<0.000000e+00> : vector<32x16xf32>
    %29 = tpu.matmul %27, %28, %cst_18 {dimension_numbers = #tpu.dot_dimension_numbers<[1], [0], [0], [1], [0, 0, 1, 1], [], []>} : vector<32x49xbf16>, vector<49x16xbf16>, vector<32x16xf32> -> vector<32x16xf32>
    %c0_19 = arith.constant 0 : index
    %c0_20 = arith.constant 0 : index
    %30 = vector.load %arg6[%c0_19, %c0_20] : memref<1x16xf32, #tpu.memory_space<vmem>>, vector<1x16xf32>
    %31 = vector.broadcast %30 : vector<1x16xf32> to vector<32x16xf32>
    %32 = arith.addf %29, %31 : vector<32x16xf32>
    %cst_21 = arith.constant 0.000000e+00 : f32
    %33 = vector.broadcast %cst_21 : f32 to vector<32x16xf32>
    %34 = arith.maximumf %32, %33 : vector<32x16xf32>
    %35 = vector.shape_cast %34 : vector<32x16xf32> to vector<2x16x16xf32>
    %cst_22 = arith.constant dense<0.000000e+00> : vector<2x16xf32>
    %36 = vector.multi_reduction <add>, %35, %cst_22 [1] : vector<2x16x16xf32> to vector<2x16xf32>
    %cst_23 = arith.constant 1.600000e+01 : f32
    %37 = vector.broadcast %cst_23 : f32 to vector<2x16xf32>
    %38 = arith.divf %36, %37 : vector<2x16xf32>
    %39 = vector.shape_cast %34 : vector<32x16xf32> to vector<16x2x16xf32>
    %cst_24 = arith.constant dense<0xFF800000> : vector<16x16xf32>
    %40 = vector.multi_reduction <maximumf>, %39, %cst_24 [1] : vector<16x2x16xf32> to vector<16x16xf32>
    %41 = vector.shape_cast %40 : vector<16x16xf32> to vector<2x8x16xf32>
    %cst_25 = arith.constant 0.000000e+00 : f32
    %42 = vector.broadcast %cst_25 : f32 to vector<2x4x16xf32>
    %c0_26 = arith.constant 0 : index
    %c0_27 = arith.constant 0 : index
    %c0_28 = arith.constant 0 : index
    %43 = vector.load %arg25[%c0_26, %c0_27, %c0_28] : memref<2x12x16xf32, #tpu.memory_space<vmem>>, vector<2x4x16xf32>
    tpu.vector_store %arg25[%c0_26, %c0_27, %c0_28], %42 {strides = array<i32>} : memref<2x12x16xf32, #tpu.memory_space<vmem>>, vector<2x4x16xf32>,
    %c0_29 = arith.constant 0 : index
    %c4 = arith.constant 4 : index
    %c0_30 = arith.constant 0 : index
    %44 = vector.load %arg25[%c0_29, %c4, %c0_30] : memref<2x12x16xf32, #tpu.memory_space<vmem>>, vector<2x8x16xf32>
    tpu.vector_store %arg25[%c0_29, %c4, %c0_30], %41 {strides = array<i32>} : memref<2x12x16xf32, #tpu.memory_space<vmem>>, vector<2x8x16xf32>,
    %c0_31 = arith.constant 0 : index
    %c0_32 = arith.constant 0 : index
    %c0_33 = arith.constant 0 : index
    %45 = vector.load %arg25[%c0_31, %c0_32, %c0_33] : memref<2x12x16xf32, #tpu.memory_space<vmem>>, vector<2x12x16xf32>
    %46 = vector.extract_strided_slice %45 {offsets = [0, 4, 0], sizes = [2, 8, 16], strides = [1, 1, 1]} : vector<2x12x16xf32> to vector<2x8x16xf32>
    %47 = vector.shape_cast %46 : vector<2x8x16xf32> to vector<16x16xf32>
    %48 = vector.extract_strided_slice %45 {offsets = [0, 0, 0], sizes = [2, 8, 16], strides = [1, 1, 1]} : vector<2x12x16xf32> to vector<2x8x16xf32>
    %49 = vector.extract_strided_slice %45 {offsets = [0, 2, 0], sizes = [2, 8, 16], strides = [1, 1, 1]} : vector<2x12x16xf32> to vector<2x8x16xf32>
    %50 = vector.extract_strided_slice %45 {offsets = [0, 4, 0], sizes = [2, 8, 16], strides = [1, 1, 1]} : vector<2x12x16xf32> to vector<2x8x16xf32>
    %51 = tpu.concatenate %48, %49, %50 in 2 : vector<2x8x16xf32>, vector<2x8x16xf32>, vector<2x8x16xf32> -> vector<2x8x48xf32>
    %52 = vector.shape_cast %51 : vector<2x8x48xf32> to vector<16x48xf32>
    %53 = arith.truncf %52 : vector<16x48xf32> to vector<16x48xbf16>
    %c0_34 = arith.constant 0 : index
    %c0_35 = arith.constant 0 : index
    %54 = vector.load %arg7[%c0_34, %c0_35] : memref<48x16xbf16, #tpu.memory_space<vmem>>, vector<48x16xbf16>
    %cst_36 = arith.constant dense<0.000000e+00> : vector<16x16xf32>
    %55 = tpu.matmul %53, %54, %cst_36 {dimension_numbers = #tpu.dot_dimension_numbers<[1], [0], [0], [1], [0, 0, 1, 1], [], []>} : vector<16x48xbf16>, vector<48x16xbf16>, vector<16x16xf32> -> vector<16x16xf32>
    %c0_37 = arith.constant 0 : index
    %c0_38 = arith.constant 0 : index
    %56 = vector.load %arg8[%c0_37, %c0_38] : memref<1x16xf32, #tpu.memory_space<vmem>>, vector<1x16xf32>
    %57 = vector.broadcast %56 : vector<1x16xf32> to vector<16x16xf32>
    %58 = arith.addf %55, %57 : vector<16x16xf32>
    %cst_39 = arith.constant 0.000000e+00 : f32
    %59 = vector.broadcast %cst_39 : f32 to vector<16x16xf32>
    %60 = arith.maximumf %58, %59 : vector<16x16xf32>
    %cst_40 = arith.constant 0.000000e+00 : f32
    %61 = vector.broadcast %cst_40 : f32 to vector<2x4x16xf32>
    %c0_41 = arith.constant 0 : index
    %c0_42 = arith.constant 0 : index
    %c0_43 = arith.constant 0 : index
    %62 = vector.load %arg26[%c0_41, %c0_42, %c0_43] : memref<2x12x16xf32, #tpu.memory_space<vmem>>, vector<2x4x16xf32>
    tpu.vector_store %arg26[%c0_41, %c0_42, %c0_43], %61 {strides = array<i32>} : memref<2x12x16xf32, #tpu.memory_space<vmem>>, vector<2x4x16xf32>,
    %63 = vector.shape_cast %60 : vector<16x16xf32> to vector<2x8x16xf32>
    %c0_44 = arith.constant 0 : index
    %c4_45 = arith.constant 4 : index
    %c0_46 = arith.constant 0 : index
    %64 = vector.load %arg26[%c0_44, %c4_45, %c0_46] : memref<2x12x16xf32, #tpu.memory_space<vmem>>, vector<2x8x16xf32>
    tpu.vector_store %arg26[%c0_44, %c4_45, %c0_46], %63 {strides = array<i32>} : memref<2x12x16xf32, #tpu.memory_space<vmem>>, vector<2x8x16xf32>,
    %c0_47 = arith.constant 0 : index
    %c0_48 = arith.constant 0 : index
    %c0_49 = arith.constant 0 : index
    %65 = vector.load %arg26[%c0_47, %c0_48, %c0_49] : memref<2x12x16xf32, #tpu.memory_space<vmem>>, vector<2x12x16xf32>
    %66 = vector.extract_strided_slice %65 {offsets = [0, 0, 0], sizes = [2, 8, 16], strides = [1, 1, 1]} : vector<2x12x16xf32> to vector<2x8x16xf32>
    %67 = vector.extract_strided_slice %65 {offsets = [0, 2, 0], sizes = [2, 8, 16], strides = [1, 1, 1]} : vector<2x12x16xf32> to vector<2x8x16xf32>
    %68 = vector.extract_strided_slice %65 {offsets = [0, 4, 0], sizes = [2, 8, 16], strides = [1, 1, 1]} : vector<2x12x16xf32> to vector<2x8x16xf32>
    %69 = tpu.concatenate %66, %67, %68 in 2 : vector<2x8x16xf32>, vector<2x8x16xf32>, vector<2x8x16xf32> -> vector<2x8x48xf32>
    %70 = vector.shape_cast %69 : vector<2x8x48xf32> to vector<16x48xf32>
    %71 = arith.truncf %70 : vector<16x48xf32> to vector<16x48xbf16>
    %c0_50 = arith.constant 0 : index
    %c0_51 = arith.constant 0 : index
    %72 = vector.load %arg9[%c0_50, %c0_51] : memref<48x16xbf16, #tpu.memory_space<vmem>>, vector<48x16xbf16>
    %cst_52 = arith.constant dense<0.000000e+00> : vector<16x16xf32>
    %73 = tpu.matmul %71, %72, %cst_52 {dimension_numbers = #tpu.dot_dimension_numbers<[1], [0], [0], [1], [0, 0, 1, 1], [], []>} : vector<16x48xbf16>, vector<48x16xbf16>, vector<16x16xf32> -> vector<16x16xf32>
    %c0_53 = arith.constant 0 : index
    %c0_54 = arith.constant 0 : index
    %74 = vector.load %arg10[%c0_53, %c0_54] : memref<1x16xf32, #tpu.memory_space<vmem>>, vector<1x16xf32>
    %75 = vector.broadcast %74 : vector<1x16xf32> to vector<16x16xf32>
    %76 = arith.addf %73, %75 : vector<16x16xf32>
    %77 = arith.addf %76, %47 : vector<16x16xf32>
    %cst_55 = arith.constant 0.000000e+00 : f32
    %78 = vector.broadcast %cst_55 : f32 to vector<16x16xf32>
    %79 = arith.maximumf %77, %78 : vector<16x16xf32>
    %80 = vector.shape_cast %79 : vector<16x16xf32> to vector<2x8x16xf32>
    %cst_56 = arith.constant dense<0.000000e+00> : vector<2x16xf32>
    %81 = vector.multi_reduction <add>, %80, %cst_56 [1] : vector<2x8x16xf32> to vector<2x16xf32>
    %cst_57 = arith.constant 8.000000e+00 : f32
    %82 = vector.broadcast %cst_57 : f32 to vector<2x16xf32>
    %83 = arith.divf %81, %82 : vector<2x16xf32>
    %c0_58 = arith.constant 0 : index
    %c0_59 = arith.constant 0 : index
    %84 = vector.load %arg1[%c0_58, %c0_59] : memref<2x2xf32, #tpu.memory_space<vmem>>, vector<2x2xf32>
    %85 = arith.truncf %84 : vector<2x2xf32> to vector<2x2xbf16>
    %c0_60 = arith.constant 0 : index
    %c0_61 = arith.constant 0 : index
    %86 = vector.load %arg13[%c0_60, %c0_61] : memref<2x32xbf16, #tpu.memory_space<vmem>>, vector<2x32xbf16>
    %cst_62 = arith.constant dense<0.000000e+00> : vector<2x32xf32>
    %87 = tpu.matmul %85, %86, %cst_62 {dimension_numbers = #tpu.dot_dimension_numbers<[1], [0], [0], [1], [0, 0, 1, 1], [], []>} : vector<2x2xbf16>, vector<2x32xbf16>, vector<2x32xf32> -> vector<2x32xf32>
    %c0_63 = arith.constant 0 : index
    %c0_64 = arith.constant 0 : index
    %88 = vector.load %arg2[%c0_63, %c0_64] : memref<2x5xf32, #tpu.memory_space<vmem>>, vector<2x5xf32>
    %89 = arith.truncf %88 : vector<2x5xf32> to vector<2x5xbf16>
    %c0_65 = arith.constant 0 : index
    %c0_66 = arith.constant 0 : index
    %90 = vector.load %arg14[%c0_65, %c0_66] : memref<5x32xbf16, #tpu.memory_space<vmem>>, vector<5x32xbf16>
    %cst_67 = arith.constant dense<0.000000e+00> : vector<2x32xf32>
    %91 = tpu.matmul %89, %90, %cst_67 {dimension_numbers = #tpu.dot_dimension_numbers<[1], [0], [0], [1], [0, 0, 1, 1], [], []>} : vector<2x5xbf16>, vector<5x32xbf16>, vector<2x32xf32> -> vector<2x32xf32>
    %92 = arith.addf %87, %91 : vector<2x32xf32>
    %93 = arith.truncf %38 : vector<2x16xf32> to vector<2x16xbf16>
    %c0_68 = arith.constant 0 : index
    %c0_69 = arith.constant 0 : index
    %94 = vector.load %arg11[%c0_68, %c0_69] : memref<16x32xbf16, #tpu.memory_space<vmem>>, vector<16x32xbf16>
    %cst_70 = arith.constant dense<0.000000e+00> : vector<2x32xf32>
    %95 = tpu.matmul %93, %94, %cst_70 {dimension_numbers = #tpu.dot_dimension_numbers<[1], [0], [0], [1], [0, 0, 1, 1], [], []>} : vector<2x16xbf16>, vector<16x32xbf16>, vector<2x32xf32> -> vector<2x32xf32>
    %96 = arith.addf %92, %95 : vector<2x32xf32>
    %97 = arith.truncf %83 : vector<2x16xf32> to vector<2x16xbf16>
    %c0_71 = arith.constant 0 : index
    %c0_72 = arith.constant 0 : index
    %98 = vector.load %arg12[%c0_71, %c0_72] : memref<16x32xbf16, #tpu.memory_space<vmem>>, vector<16x32xbf16>
    %cst_73 = arith.constant dense<0.000000e+00> : vector<2x32xf32>
    %99 = tpu.matmul %97, %98, %cst_73 {dimension_numbers = #tpu.dot_dimension_numbers<[1], [0], [0], [1], [0, 0, 1, 1], [], []>} : vector<2x16xbf16>, vector<16x32xbf16>, vector<2x32xf32> -> vector<2x32xf32>
    %100 = arith.addf %96, %99 : vector<2x32xf32>
    %c0_74 = arith.constant 0 : index
    %c0_75 = arith.constant 0 : index
    %101 = vector.load %arg15[%c0_74, %c0_75] : memref<1x32xf32, #tpu.memory_space<vmem>>, vector<1x32xf32>
    %102 = vector.broadcast %101 : vector<1x32xf32> to vector<2x32xf32>
    %103 = arith.addf %100, %102 : vector<2x32xf32>
    %cst_76 = arith.constant 0.000000e+00 : f32
    %104 = vector.broadcast %cst_76 : f32 to vector<2x32xf32>
    %105 = arith.maximumf %103, %104 : vector<2x32xf32>
    %106 = arith.truncf %105 : vector<2x32xf32> to vector<2x32xbf16>
    %c0_77 = arith.constant 0 : index
    %c0_78 = arith.constant 0 : index
    %107 = vector.load %arg16[%c0_77, %c0_78] : memref<32x32xbf16, #tpu.memory_space<vmem>>, vector<32x32xbf16>
    %cst_79 = arith.constant dense<0.000000e+00> : vector<2x32xf32>
    %108 = tpu.matmul %106, %107, %cst_79 {dimension_numbers = #tpu.dot_dimension_numbers<[1], [0], [0], [1], [0, 0, 1, 1], [], []>} : vector<2x32xbf16>, vector<32x32xbf16>, vector<2x32xf32> -> vector<2x32xf32>
    %c0_80 = arith.constant 0 : index
    %c0_81 = arith.constant 0 : index
    %109 = vector.load %arg17[%c0_80, %c0_81] : memref<1x32xf32, #tpu.memory_space<vmem>>, vector<1x32xf32>
    %110 = vector.broadcast %109 : vector<1x32xf32> to vector<2x32xf32>
    %111 = arith.addf %108, %110 : vector<2x32xf32>
    %c0_82 = arith.constant 0 : index
    %c0_83 = arith.constant 0 : index
    %112 = vector.load %arg22[%c0_82, %c0_83] : memref<2x32xf32, #tpu.memory_space<vmem>>, vector<2x32xf32>
    tpu.vector_store %arg22[%c0_82, %c0_83], %111 {strides = array<i32>} : memref<2x32xf32, #tpu.memory_space<vmem>>, vector<2x32xf32>,
    %113 = arith.truncf %111 : vector<2x32xf32> to vector<2x32xbf16>
    %c0_84 = arith.constant 0 : index
    %c0_85 = arith.constant 0 : index
    %114 = vector.load %arg18[%c0_84, %c0_85] : memref<32x128xbf16, #tpu.memory_space<vmem>>, vector<32x128xbf16>
    %cst_86 = arith.constant dense<0.000000e+00> : vector<2x128xf32>
    %115 = tpu.matmul %113, %114, %cst_86 {dimension_numbers = #tpu.dot_dimension_numbers<[1], [0], [0], [1], [0, 0, 1, 1], [], []>} : vector<2x32xbf16>, vector<32x128xbf16>, vector<2x128xf32> -> vector<2x128xf32>
    %c0_87 = arith.constant 0 : index
    %c0_88 = arith.constant 0 : index
    %116 = vector.load %arg19[%c0_87, %c0_88] : memref<1x128xf32, #tpu.memory_space<vmem>>, vector<1x128xf32>
    %117 = vector.broadcast %116 : vector<1x128xf32> to vector<2x128xf32>
    %118 = arith.addf %115, %117 : vector<2x128xf32>
    %cst_89 = arith.constant 0.000000e+00 : f32
    %119 = vector.broadcast %cst_89 : f32 to vector<2x128xf32>
    %120 = arith.cmpf oge, %118, %119 : vector<2x128xf32>
    %cst_90 = arith.constant 2.000000e-01 : f32
    %121 = vector.broadcast %cst_90 : f32 to vector<2x128xf32>
    %122 = arith.mulf %121, %118 : vector<2x128xf32>
    %123 = arith.select %120, %118, %122 : vector<2x128xi1>, vector<2x128xf32>
    %124 = arith.truncf %123 : vector<2x128xf32> to vector<2x128xbf16>
    %c0_91 = arith.constant 0 : index
    %c0_92 = arith.constant 0 : index
    %125 = vector.load %arg20[%c0_91, %c0_92] : memref<128x128xbf16, #tpu.memory_space<vmem>>, vector<128x128xbf16>
    %cst_93 = arith.constant dense<0.000000e+00> : vector<2x128xf32>
    %126 = tpu.matmul %124, %125, %cst_93 {dimension_numbers = #tpu.dot_dimension_numbers<[1], [0], [0], [1], [0, 0, 1, 1], [], []>} : vector<2x128xbf16>, vector<128x128xbf16>, vector<2x128xf32> -> vector<2x128xf32>
    %c0_94 = arith.constant 0 : index
    %c0_95 = arith.constant 0 : index
    %127 = vector.load %arg21[%c0_94, %c0_95] : memref<1x128xf32, #tpu.memory_space<vmem>>, vector<1x128xf32>
    %128 = vector.broadcast %127 : vector<1x128xf32> to vector<2x128xf32>
    %129 = arith.addf %126, %128 : vector<2x128xf32>
    %c0_96 = arith.constant 0 : index
    %c0_97 = arith.constant 0 : index
    %130 = vector.load %arg23[%c0_96, %c0_97] : memref<2x128xf32, #tpu.memory_space<vmem>>, vector<2x128xf32>
    tpu.vector_store %arg23[%c0_96, %c0_97], %129 {strides = array<i32>} : memref<2x128xf32, #tpu.memory_space<vmem>>, vector<2x128xf32>,
    return
  }
}

</mosaic_0001>

<llo_original>
// kernel: ms2fnet_tcn_forward.1
$region0: #{ms2fnet_tcn_forward.1}
  #allocation0 [shape = 'u32[]', space=smem, size = 0x4, offset = 0x4, fixed_abs, tag = 'smem constant byte address 0x4 - core index']
  #allocation1 [shape = 'u32[72,128]{1,0:T(1,128)}', space=vmem, size = 0x9000, scoped, tag = 'internal scratch']
  #allocation2 [shape = 'f32[2,18,16]{2,1,0:T(8,128)}', space=vmem, size = 0x6000, scoped, tag = 'scratch operand']
  #allocation3 [shape = 'f32[2,12,16]{2,1,0:T(8,128)}', space=vmem, size = 0x4000, scoped, tag = 'scratch operand']
  #allocation4 [shape = 'f32[2,12,16]{2,1,0:T(8,128)}', space=vmem, size = 0x4000, scoped, tag = 'scratch operand']
  %s0 = inlined_call_operand.vmem [shape: f32[2,18,1], index: 0, kind: input, shape index: {}]
  %s1 = inlined_call_operand.vmem [shape: f32[2,2], index: 1, kind: input, shape index: {}]
  %s2 = inlined_call_operand.vmem [shape: f32[2,5], index: 2, kind: input, shape index: {}]
  %s3 = inlined_call_operand.vmem [shape: bf16[3,16], index: 3, kind: input, shape index: {}]
  %s4 = inlined_call_operand.vmem [shape: f32[1,16], index: 4, kind: input, shape index: {}]
  %s5 = inlined_call_operand.vmem [shape: bf16[49,16], index: 5, kind: input, shape index: {}]
  %s6 = inlined_call_operand.vmem [shape: f32[1,16], index: 6, kind: input, shape index: {}]
  %s7 = inlined_call_operand.vmem [shape: bf16[48,16], index: 7, kind: input, shape index: {}]
  %s8 = inlined_call_operand.vmem [shape: f32[1,16], index: 8, kind: input, shape index: {}]
  %s9 = inlined_call_operand.vmem [shape: bf16[48,16], index: 9, kind: input, shape index: {}]
  %s10 = inlined_call_operand.vmem [shape: f32[1,16], index: 10, kind: input, shape index: {}]
  %s11 = inlined_call_operand.vmem [shape: bf16[16,32], index: 11, kind: input, shape index: {}]
  %s12 = inlined_call_operand.vmem [shape: bf16[16,32], index: 12, kind: input, shape index: {}]
  %s13 = inlined_call_operand.vmem [shape: bf16[2,32], index: 13, kind: input, shape index: {}]
  %s14 = inlined_call_operand.vmem [shape: bf16[5,32], index: 14, kind: input, shape index: {}]
  %s15 = inlined_call_operand.vmem [shape: f32[1,32], index: 15, kind: input, shape index: {}]
  %s16 = inlined_call_operand.vmem [shape: bf16[32,32], index: 16, kind: input, shape index: {}]
  %s17 = inlined_call_operand.vmem [shape: f32[1,32], index: 17, kind: input, shape index: {}]
  %s18 = inlined_call_operand.vmem [shape: bf16[32,128], index: 18, kind: input, shape index: {}]
  %s19 = inlined_call_operand.vmem [shape: f32[1,128], index: 19, kind: input, shape index: {}]
  %s20 = inlined_call_operand.vmem [shape: bf16[128,128], index: 20, kind: input, shape index: {}]
  %s21 = inlined_call_operand.vmem [shape: f32[1,128], index: 21, kind: input, shape index: {}]
  %s22 = inlined_call_operand.hbm [shape: f32[2,32], index: 22, kind: output, shape index: {0}]
  %s23 = inlined_call_operand.vmem [shape: f32[2,128], index: 23, kind: output, shape index: {1}]
  %24 = xla_tuple %s22, %s23
  %s25 = sld [smem:[#allocation0]]
  $region106: #{ms2fnet_tcn_forward.1} parent=0
    _
  %s27 = ssub.s32 1, %s25
  %s28 = scalar_select 0, %s27, %s25
  $region1: #{ms2fnet_tcn_forward.1} parent=0
    #allocation5 [shape = 'u8[1024]{0}', space=vmem, size = 0x400, scoped, tag = 'output window, operand 0, single buffered']
    #allocation6 [shape = 's32[1]{0}', space=sflag, size = 0x4, scoped, tag = 'scoped memory for ms2fnet_tcn_forward.1']
    %29 = vsyncpa [#allocation6], 0
    // Predicated region
    $region2: #{ms2fnet_tcn_forward.1} parent=1 // pred_check
      _
    $region3: #{ms2fnet_tcn_forward.1} parent=1 // pred_check_branch
      %31 = sbr.rel (0) target = $region5
    $region4: #{ms2fnet_tcn_forward.1} parent=1 // pred_region
      _
    $region5: #{ms2fnet_tcn_forward.1} parent=1 // pred_fallthru
      _
    // Predicated region
    $region6: #{ms2fnet_tcn_forward.1} parent=1 // pred_check
      _
    $region7: #{ms2fnet_tcn_forward.1} parent=1 // pred_check_branch
      %33 = sbr.rel (0) target = $region9
    $region8: #{ms2fnet_tcn_forward.1} parent=1 // pred_region
      _
    $region9: #{ms2fnet_tcn_forward.1} parent=1 // pred_fallthru
      _
    // Predicated region
    $region10: #{ms2fnet_tcn_forward.1} parent=1 // pred_check
      _
    $region11: #{ms2fnet_tcn_forward.1} parent=1 // pred_check_branch
      %35 = sbr.rel (0) target = $region13
    $region12: #{ms2fnet_tcn_forward.1} parent=1 // pred_region
      _
    $region13: #{ms2fnet_tcn_forward.1} parent=1 // pred_fallthru
      _
    // Predicated region
    $region14: #{ms2fnet_tcn_forward.1} parent=1 // pred_check
      _
    $region15: #{ms2fnet_tcn_forward.1} parent=1 // pred_check_branch
      %37 = sbr.rel (0) target = $region17
    $region16: #{ms2fnet_tcn_forward.1} parent=1 // pred_region
      _
    $region17: #{ms2fnet_tcn_forward.1} parent=1 // pred_fallthru
      _
    // Predicated region
    $region18: #{ms2fnet_tcn_forward.1} parent=1 // pred_check
      _
    $region19: #{ms2fnet_tcn_forward.1} parent=1 // pred_check_branch
      %39 = sbr.rel (0) target = $region21
    $region20: #{ms2fnet_tcn_forward.1} parent=1 // pred_region
      _
    $region21: #{ms2fnet_tcn_forward.1} parent=1 // pred_fallthru
      _
    // Predicated region
    $region22: #{ms2fnet_tcn_forward.1} parent=1 // pred_check
      _
    $region23: #{ms2fnet_tcn_forward.1} parent=1 // pred_check_branch
      %41 = sbr.rel (0) target = $region25
    $region24: #{ms2fnet_tcn_forward.1} parent=1 // pred_region
      _
    $region25: #{ms2fnet_tcn_forward.1} parent=1 // pred_fallthru
      _
    // Predicated region
    $region26: #{ms2fnet_tcn_forward.1} parent=1 // pred_check
      _
    $region27: #{ms2fnet_tcn_forward.1} parent=1 // pred_check_branch
      %43 = sbr.rel (0) target = $region29
    $region28: #{ms2fnet_tcn_forward.1} parent=1 // pred_region
      _
    $region29: #{ms2fnet_tcn_forward.1} parent=1 // pred_fallthru
      _
    // Predicated region
    $region30: #{ms2fnet_tcn_forward.1} parent=1 // pred_check
      _
    $region31: #{ms2fnet_tcn_forward.1} parent=1 // pred_check_branch
      %45 = sbr.rel (0) target = $region33
    $region32: #{ms2fnet_tcn_forward.1} parent=1 // pred_region
      _
    $region33: #{ms2fnet_tcn_forward.1} parent=1 // pred_fallthru
      _
    // Predicated region
    $region34: #{ms2fnet_tcn_forward.1} parent=1 // pred_check
      _
    $region35: #{ms2fnet_tcn_forward.1} parent=1 // pred_check_branch
      %47 = sbr.rel (0) target = $region37
    $region36: #{ms2fnet_tcn_forward.1} parent=1 // pred_region
      _
    $region37: #{ms2fnet_tcn_forward.1} parent=1 // pred_fallthru
      _
    // Predicated region
    $region38: #{ms2fnet_tcn_forward.1} parent=1 // pred_check
      _
    $region39: #{ms2fnet_tcn_forward.1} parent=1 // pred_check_branch
      %49 = sbr.rel (0) target = $region41
    $region40: #{ms2fnet_tcn_forward.1} parent=1 // pred_region
      _
    $region41: #{ms2fnet_tcn_forward.1} parent=1 // pred_fallthru
      _
    // Predicated region
    $region42: #{ms2fnet_tcn_forward.1} parent=1 // pred_check
      _
    $region43: #{ms2fnet_tcn_forward.1} parent=1 // pred_check_branch
      %51 = sbr.rel (0) target = $region45
    $region44: #{ms2fnet_tcn_forward.1} parent=1 // pred_region
      _
    $region45: #{ms2fnet_tcn_forward.1} parent=1 // pred_fallthru
      _
    // Predicated region
    $region46: #{ms2fnet_tcn_forward.1} parent=1 // pred_check
      _
    $region47: #{ms2fnet_tcn_forward.1} parent=1 // pred_check_branch
      %53 = sbr.rel (0) target = $region49
    $region48: #{ms2fnet_tcn_forward.1} parent=1 // pred_region
      _
    $region49: #{ms2fnet_tcn_forward.1} parent=1 // pred_fallthru
      _
    // Predicated region
    $region50: #{ms2fnet_tcn_forward.1} parent=1 // pred_check
      _
    $region51: #{ms2fnet_tcn_forward.1} parent=1 // pred_check_branch
      %55 = sbr.rel (0) target = $region53
    $region52: #{ms2fnet_tcn_forward.1} parent=1 // pred_region
      _
    $region53: #{ms2fnet_tcn_forward.1} parent=1 // pred_fallthru
      _
    // Predicated region
    $region54: #{ms2fnet_tcn_forward.1} parent=1 // pred_check
      _
    $region55: #{ms2fnet_tcn_forward.1} parent=1 // pred_check_branch
      %57 = sbr.rel (0) target = $region57
    $region56: #{ms2fnet_tcn_forward.1} parent=1 // pred_region
      _
    $region57: #{ms2fnet_tcn_forward.1} parent=1 // pred_fallthru
      _
    // Predicated region
    $region58: #{ms2fnet_tcn_forward.1} parent=1 // pred_check
      _
    $region59: #{ms2fnet_tcn_forward.1} parent=1 // pred_check_branch
      %59 = sbr.rel (0) target = $region61
    $region60: #{ms2fnet_tcn_forward.1} parent=1 // pred_region
      _
    $region61: #{ms2fnet_tcn_forward.1} parent=1 // pred_fallthru
      _
    // Predicated region
    $region62: #{ms2fnet_tcn_forward.1} parent=1 // pred_check
      _
    $region63: #{ms2fnet_tcn_forward.1} parent=1 // pred_check_branch
      %61 = sbr.rel (0) target = $region65
    $region64: #{ms2fnet_tcn_forward.1} parent=1 // pred_region
      _
    $region65: #{ms2fnet_tcn_forward.1} parent=1 // pred_fallthru
      _
    // Predicated region
    $region66: #{ms2fnet_tcn_forward.1} parent=1 // pred_check
      _
    $region67: #{ms2fnet_tcn_forward.1} parent=1 // pred_check_branch
      %63 = sbr.rel (0) target = $region69
    $region68: #{ms2fnet_tcn_forward.1} parent=1 // pred_region
      _
    $region69: #{ms2fnet_tcn_forward.1} parent=1 // pred_fallthru
      _
    // Predicated region
    $region70: #{ms2fnet_tcn_forward.1} parent=1 // pred_check
      _
    $region71: #{ms2fnet_tcn_forward.1} parent=1 // pred_check_branch
      %65 = sbr.rel (0) target = $region73
    $region72: #{ms2fnet_tcn_forward.1} parent=1 // pred_region
      _
    $region73: #{ms2fnet_tcn_forward.1} parent=1 // pred_fallthru
      _
    // Predicated region
    $region74: #{ms2fnet_tcn_forward.1} parent=1 // pred_check
      _
    $region75: #{ms2fnet_tcn_forward.1} parent=1 // pred_check_branch
      %67 = sbr.rel (0) target = $region77
    $region76: #{ms2fnet_tcn_forward.1} parent=1 // pred_region
      _
    $region77: #{ms2fnet_tcn_forward.1} parent=1 // pred_fallthru
      _
    // Predicated region
    $region78: #{ms2fnet_tcn_forward.1} parent=1 // pred_check
      _
    $region79: #{ms2fnet_tcn_forward.1} parent=1 // pred_check_branch
      %69 = sbr.rel (0) target = $region81
    $region80: #{ms2fnet_tcn_forward.1} parent=1 // pred_region
      _
    $region81: #{ms2fnet_tcn_forward.1} parent=1 // pred_fallthru
      _
    // Predicated region
    $region82: #{ms2fnet_tcn_forward.1} parent=1 // pred_check
      _
    $region83: #{ms2fnet_tcn_forward.1} parent=1 // pred_check_branch
      %71 = sbr.rel (0) target = $region85
    $region84: #{ms2fnet_tcn_forward.1} parent=1 // pred_region
      _
    $region85: #{ms2fnet_tcn_forward.1} parent=1 // pred_fallthru
      _
    // Predicated region
    $region86: #{ms2fnet_tcn_forward.1} parent=1 // pred_check
      _
    $region87: #{ms2fnet_tcn_forward.1} parent=1 // pred_check_branch
      %73 = sbr.rel (0) target = $region89
    $region88: #{ms2fnet_tcn_forward.1} parent=1 // pred_region
      _
    $region89: #{ms2fnet_tcn_forward.1} parent=1 // pred_fallthru
      _
    %v75 = vld [vmem:[%s0] sm:$0xff]
    %v76 = vld [vmem:[%s0 + $0x8] sm:$0xff]
    %v77 = vld [vmem:[%s0 + $0x10] sm:$0x3]
    %v78 = vld [vmem:[%s0 + $0x18] sm:$0xff]
    %v79 = vld [vmem:[%s0 + $0x20] sm:$0xff]
    %v80 = vld [vmem:[%s0 + $0x28] sm:$0x3]
    %vm87 = vcmask 1045504
    %v88 = vrot.slane %v75, 2
    %v89 = vrot.slane %v76, 2
    %v90 = vsel %vm87, %v88, %v89
    %v91 = vrot.slane %v77, 2
    %v92 = vsel %vm87, %v89, %v91
    %v93 = vrot.slane %v78, 2
    %v94 = vrot.slane %v79, 2
    %v95 = vsel %vm87, %v93, %v94
    %v96 = vrot.slane %v80, 2
    %v97 = vsel %vm87, %v94, %v96
    %vm98 = vcmask 1046528
    %v99 = vrot.slane %v75, 1
    %v100 = vrot.slane %v76, 1
    %v101 = vsel %vm98, %v99, %v100
    %v102 = vrot.slane %v77, 1
    %v103 = vsel %vm98, %v100, %v102
    %v104 = vrot.slane %v78, 1
    %v105 = vrot.slane %v79, 1
    %v106 = vsel %vm98, %v104, %v105
    %v107 = vrot.slane %v80, 1
    %v108 = vsel %vm98, %v105, %v107
    %109 = vrot.lane.b32.xlu0 %v101, 1
    %v110 = vpop.permute.xlu0 %109
    %111 = vrot.lane.b32.xlu0 %v103, 1
    %v112 = vpop.permute.xlu0 %111
    %113 = vrot.lane.b32.xlu0 %v106, 1
    %v114 = vpop.permute.xlu0 %113
    %115 = vrot.lane.b32.xlu0 %v108, 1
    %v116 = vpop.permute.xlu0 %115
    %121 = vrot.lane.b32.xlu0 %v90, 2
    %v122 = vpop.permute.xlu0 %121
    %123 = vrot.lane.b32.xlu0 %v92, 2
    %v124 = vpop.permute.xlu0 %123
    %125 = vrot.lane.b32.xlu0 %v95, 2
    %v126 = vpop.permute.xlu0 %125
    %127 = vrot.lane.b32.xlu0 %v97, 2
    %v128 = vpop.permute.xlu0 %127
    %vm133 = vcmask 7168
    %v134 = vsel %vm133, %v75, %v110
    %v135 = vsel %vm133, %v76, %v112
    %v136 = vsel %vm133, %v78, %v114
    %v137 = vsel %vm133, %v79, %v116
    %vm138 = vcmask 15360
    %v139 = vsel %vm138, %v134, %v122
    %v140 = vsel %vm138, %v135, %v124
    %v141 = vsel %vm138, %v136, %v126
    %v142 = vsel %vm138, %v137, %v128
    %v143 = vpack.c.bf16 %v140, %v139
    %v144 = vpack.c.bf16 %v142, %v141
    %v145 = vld [vmem:[%s3] sm:$0x3]
    %v146 = vld [vmem:[%s4] sm:$0x1]
    %v148 = vperm.slane %v146, 0
    %vm150 = vcmask 23552
    %v152 = vsel %vm150, %v143, 0
    %v155 = vsel %vm150, %v144, 0
    %vm157 = vcmask 1040384
    %vm158 = vcmask 1041408
    %v159 = vsel %vm157, 4294967295, 65535
    %v160 = vsel %vm158, %v159, 0
    %v162 = vand.u32 %v145, %v160
    %164 = vmatpush.bf16.msra.mxu0 0
    %165 = vmatpush.bf16.msra.mxu0 0
    %166 = vmatpush.bf16.msra.mxu0 0
    %167 = vmatpush.bf16.msra.mxu0 0
    %168 = vmatpush.bf16.msra.mxu0 0
    %169 = vmatpush.bf16.msra.mxu0 0
    %170 = vmatpush.bf16.msra.mxu0 0
    %171 = vmatpush.bf16.msra.mxu0 %v162
    %172 = vmatmul.bf16.gmra.mxu0 %v152
    %v173 = vpop.f32.mrf.mxu0
    %v174 = vadd.f32 %v148, %v173
    %v175 = vpop.f32.mrf.mxu0
    %v176 = vadd.f32 %v148, %v175
    %177 = vmatmul.bf16.gmra.mxu0 %v155
    %v178 = vpop.f32.mrf.mxu0
    %v179 = vadd.f32 %v148, %v178
    %v180 = vpop.f32.mrf.mxu0
    %v181 = vadd.f32 %v148, %v180
    %182 = vdwg.mxu0
    %v183 = vmax.f32 %v174, 0.0
    %v184 = vmax.f32 %v176, 0.0
    %v185 = vmax.f32 %v179, 0.0
    %v186 = vmax.f32 %v181, 0.0
    %vm187 = vcmask 123904
    %188 = vst.msk [vmem:[#allocation2] sm:$0x3] %vm187, 0.0
    %189 = vst.msk [vmem:[#allocation2 + $0x18] sm:$0x3] %vm187, 0.0
    %vm190 = vcmask 130048
    %191 = vst.msk [vmem:[#allocation2 + $0x2] sm:$0xff] %vm190, %v183
    %192 = vst.msk [vmem:[#allocation2 + $0xa] sm:$0xff] %vm190, %v184
    %193 = vst.msk [vmem:[#allocation2 + $0x1a] sm:$0xff] %vm190, %v185
    %194 = vst.msk [vmem:[#allocation2 + $0x22] sm:$0xff] %vm190, %v186
    %v195 = vld [vmem:[#allocation2] sm:$0xff]
    %v196 = vld [vmem:[#allocation2 + $0x8] sm:$0xff]
    %v197 = vld [vmem:[#allocation2 + $0x10] sm:$0x3]
    %v198 = vld [vmem:[#allocation2 + $0x18] sm:$0xff]
    %v199 = vld [vmem:[#allocation2 + $0x20] sm:$0xff]
    %v200 = vld [vmem:[#allocation2 + $0x28] sm:$0x3]
    %v207 = vrot.slane %v195, 1
    %v208 = vrot.slane %v196, 1
    %v209 = vsel %vm98, %v207, %v208
    %v210 = vrot.slane %v197, 1
    %v211 = vsel %vm98, %v208, %v210
    %v212 = vrot.slane %v198, 1
    %v213 = vrot.slane %v199, 1
    %v214 = vsel %vm98, %v212, %v213
    %v215 = vrot.slane %v200, 1
    %v216 = vsel %vm98, %v213, %v215
    %217 = vrot.lane.b32.xlu0 %v209, 16
    %v218 = vpop.permute.xlu0 %217
    %219 = vrot.lane.b32.xlu0 %v211, 16
    %v220 = vpop.permute.xlu0 %219
    %221 = vrot.lane.b32.xlu0 %v214, 16
    %v222 = vpop.permute.xlu0 %221
    %223 = vrot.lane.b32.xlu0 %v216, 16
    %v224 = vpop.permute.xlu0 %223
    %v229 = vrot.slane %v195, 2
    %v230 = vrot.slane %v196, 2
    %v231 = vsel %vm87, %v229, %v230
    %v232 = vrot.slane %v197, 2
    %v233 = vsel %vm87, %v230, %v232
    %v234 = vrot.slane %v198, 2
    %v235 = vrot.slane %v199, 2
    %v236 = vsel %vm87, %v234, %v235
    %v237 = vrot.slane %v200, 2
    %v238 = vsel %vm87, %v235, %v237
    %239 = vrot.lane.b32.xlu0 %v231, 32
    %v240 = vpop.permute.xlu0 %239
    %241 = vrot.lane.b32.xlu0 %v233, 32
    %v242 = vpop.permute.xlu0 %241
    %243 = vrot.lane.b32.xlu0 %v236, 32
    %v244 = vpop.permute.xlu0 %243
    %245 = vrot.lane.b32.xlu0 %v238, 32
    %v246 = vpop.permute.xlu0 %245
    %v251 = vsel %vm190, %v195, %v218
    %v252 = vsel %vm190, %v196, %v220
    %v253 = vsel %vm190, %v198, %v222
    %v254 = vsel %vm190, %v199, %v224
    %vm255 = vcmask 261120
    %v256 = vsel %vm255, %v251, %v240
    %v257 = vsel %vm255, %v252, %v242
    %v258 = vsel %vm255, %v253, %v244
    %v259 = vsel %vm255, %v254, %v246
    %260 = vrot.lane.b32.xlu0 %v90, 48
    %v261 = vpop.permute.xlu0 %260
    %262 = vrot.lane.b32.xlu0 %v92, 48
    %v263 = vpop.permute.xlu0 %262
    %264 = vrot.lane.b32.xlu0 %v95, 48
    %v265 = vpop.permute.xlu0 %264
    %266 = vrot.lane.b32.xlu0 %v97, 48
    %v267 = vpop.permute.xlu0 %266
    %vm272 = vcmask 392192
    %v273 = vsel %vm272, %v256, %v261
    %v274 = vsel %vm272, %v257, %v263
    %v275 = vsel %vm272, %v258, %v265
    %v276 = vsel %vm272, %v259, %v267
    %v277 = vpack.c.bf16 %v274, %v273
    %v278 = vpack.c.bf16 %v276, %v275
    %v279 = vld [vmem:[%s5] sm:$0xf]
    %v280 = vld [vmem:[%s5 + $0x4] sm:$0xf]
    %v281 = vld [vmem:[%s5 + $0x8] sm:$0xf]
    %v282 = vld [vmem:[%s5 + $0xc] sm:$0xf]
    %v283 = vld [vmem:[%s5 + $0x10] sm:$0xf]
    %v284 = vld [vmem:[%s5 + $0x14] sm:$0xf]
    %v285 = vld [vmem:[%s5 + $0x18] sm:$0x1]
    %v286 = vld [vmem:[%s6] sm:$0x1]
    %v288 = vperm.slane %v286, 0
    %v297 = vunpack.c.l.b16 %v279
    %v298 = vunpack.c.l.b16 %v280
    %v299 = vunpack.c.l.b16 %v281
    %v300 = vunpack.c.l.b16 %v282
    %v301 = vunpack.c.l.b16 %v283
    %v302 = vunpack.c.l.b16 %v284
    %v303 = vunpack.c.l.b16 %v285
    %v304 = vpack.c.b16 %v298, %v297
    %v305 = vpack.c.b16 %v300, %v299
    %v306 = vpack.c.b16 %v302, %v301
    %v307 = vpack.c.b16 %v303, %v303
    %vm311 = vcmask 400384
    %v313 = vsel %vm311, %v277, 0
    %v316 = vsel %vm311, %v278, 0
    %v318 = vsel 0, 4294967295, 65535
    %v319 = vsel %vm157, %v318, 0
    %v321 = vand.u32 %v307, %v319
    %323 = vmatpush.bf16.msra.mxu0 0
    %324 = vmatpush.bf16.msra.mxu0 0
    %325 = vmatpush.bf16.msra.mxu0 0
    %326 = vmatpush.bf16.msra.mxu0 0
    %327 = vmatpush.bf16.msra.mxu0 %v321
    %328 = vmatpush.bf16.msra.mxu0 %v306
    %329 = vmatpush.bf16.msra.mxu0 %v305
    %330 = vmatpush.bf16.msra.mxu0 %v304
    %331 = vmatmul.bf16.gmra.mxu0 %v313
    %v332 = vpop.f32.mrf.mxu0
    %v333 = vadd.f32 %v288, %v332
    %v334 = vpop.f32.mrf.mxu0
    %v335 = vadd.f32 %v288, %v334
    %336 = vmatmul.bf16.gmra.mxu0 %v316
    %v337 = vpop.f32.mrf.mxu0
    %v338 = vadd.f32 %v288, %v337
    %v339 = vpop.f32.mrf.mxu0
    %v340 = vadd.f32 %v288, %v339
    %341 = vdwg.mxu0
    %v342 = vmax.f32 %v333, 0.0
    %v343 = vmax.f32 %v335, 0.0
    %v344 = vmax.f32 %v338, 0.0
    %v345 = vmax.f32 %v340, 0.0
    %v346 = vsel %vm190, %v342, 0.0
    %v347 = vsel %vm190, %v343, 0.0
    %v348 = vadd.f32 %v346, %v347
    %v349 = vrot.slane %v348, 4
    %v350 = vadd.f32 %v348, %v349
    %v351 = vrot.slane %v350, 2
    %v352 = vadd.f32 %v350, %v351
    %v353 = vrot.slane %v352, 1
    %v354 = vadd.f32 %v352, %v353
    %v355 = vsel %vm190, %v344, 0.0
    %v356 = vsel %vm190, %v345, 0.0
    %v357 = vadd.f32 %v355, %v356
    %v358 = vrot.slane %v357, 4
    %v359 = vadd.f32 %v357, %v358
    %v360 = vrot.slane %v359, 2
    %v361 = vadd.f32 %v359, %v360
    %v362 = vrot.slane %v361, 1
    %v363 = vadd.f32 %v361, %v362
    %v364 = vrcp.pop 16.0
    %v365 = vmul.f32 16.0, %v364
    %v366 = vsub.f32 1.0, %v365
    %v367 = vmul.f32 %v364, %v366
    %v368 = vadd.f32 %v364, %v367
    %vm369 = vweird.f32 %v364
    %v370 = vsel %vm369, %v364, %v368
    %v371 = vmul.f32 %v354, %v370
    %v372 = vmul.f32 %v363, %v370
    %v377 = vrot.slane %v342, 2
    %v378 = vrot.slane %v342, 4
    %v379 = vrot.slane %v342, 6
    %v380 = vrot.slane %v343, 2
    %v381 = vrot.slane %v343, 4
    %v382 = vrot.slane %v343, 6
    %v383 = vrot.slane %v344, 2
    %v384 = vrot.slane %v344, 4
    %v385 = vrot.slane %v344, 6
    %v386 = vrot.slane %v345, 2
    %v387 = vrot.slane %v345, 4
    %v388 = vrot.slane %v345, 6
    %v401 = vsel %vm187, %v342, -inf
    %v402 = vrot.slane %v401, 4
    %v403 = vmax.f32 %v401, %v402
    %v404 = vrot.slane %v403, 2
    %v405 = vmax.f32 %v403, %v404
    %v406 = vrot.slane %v405, 1
    %v407 = vmax.f32 %v405, %v406
    %v408 = vsel %vm187, %v377, -inf
    %v409 = vrot.slane %v408, 4
    %v410 = vmax.f32 %v408, %v409
    %v411 = vrot.slane %v410, 2
    %v412 = vmax.f32 %v410, %v411
    %v413 = vrot.slane %v412, 1
    %v414 = vmax.f32 %v412, %v413
    %v415 = vsel %vm187, %v378, -inf
    %v416 = vrot.slane %v415, 4
    %v417 = vmax.f32 %v415, %v416
    %v418 = vrot.slane %v417, 2
    %v419 = vmax.f32 %v417, %v418
    %v420 = vrot.slane %v419, 1
    %v421 = vmax.f32 %v419, %v420
    %v422 = vsel %vm187, %v379, -inf
    %v423 = vrot.slane %v422, 4
    %v424 = vmax.f32 %v422, %v423
    %v425 = vrot.slane %v424, 2
    %v426 = vmax.f32 %v424, %v425
    %v427 = vrot.slane %v426, 1
    %v428 = vmax.f32 %v426, %v427
    %v429 = vsel %vm187, %v343, -inf
    %v430 = vrot.slane %v429, 4
    %v431 = vmax.f32 %v429, %v430
    %v432 = vrot.slane %v431, 2
    %v433 = vmax.f32 %v431, %v432
    %v434 = vrot.slane %v433, 1
    %v435 = vmax.f32 %v433, %v434
    %v436 = vsel %vm187, %v380, -inf
    %v437 = vrot.slane %v436, 4
    %v438 = vmax.f32 %v436, %v437
    %v439 = vrot.slane %v438, 2
    %v440 = vmax.f32 %v438, %v439
    %v441 = vrot.slane %v440, 1
    %v442 = vmax.f32 %v440, %v441
    %v443 = vsel %vm187, %v381, -inf
    %v444 = vrot.slane %v443, 4
    %v445 = vmax.f32 %v443, %v444
    %v446 = vrot.slane %v445, 2
    %v447 = vmax.f32 %v445, %v446
    %v448 = vrot.slane %v447, 1
    %v449 = vmax.f32 %v447, %v448
    %v450 = vsel %vm187, %v382, -inf
    %v451 = vrot.slane %v450, 4
    %v452 = vmax.f32 %v450, %v451
    %v453 = vrot.slane %v452, 2
    %v454 = vmax.f32 %v452, %v453
    %v455 = vrot.slane %v454, 1
    %v456 = vmax.f32 %v454, %v455
    %v457 = vsel %vm187, %v344, -inf
    %v458 = vrot.slane %v457, 4
    %v459 = vmax.f32 %v457, %v458
    %v460 = vrot.slane %v459, 2
    %v461 = vmax.f32 %v459, %v460
    %v462 = vrot.slane %v461, 1
    %v463 = vmax.f32 %v461, %v462
    %v464 = vsel %vm187, %v383, -inf
    %v465 = vrot.slane %v464, 4
    %v466 = vmax.f32 %v464, %v465
    %v467 = vrot.slane %v466, 2
    %v468 = vmax.f32 %v466, %v467
    %v469 = vrot.slane %v468, 1
    %v470 = vmax.f32 %v468, %v469
    %v471 = vsel %vm187, %v384, -inf
    %v472 = vrot.slane %v471, 4
    %v473 = vmax.f32 %v471, %v472
    %v474 = vrot.slane %v473, 2
    %v475 = vmax.f32 %v473, %v474
    %v476 = vrot.slane %v475, 1
    %v477 = vmax.f32 %v475, %v476
    %v478 = vsel %vm187, %v385, -inf
    %v479 = vrot.slane %v478, 4
    %v480 = vmax.f32 %v478, %v479
    %v481 = vrot.slane %v480, 2
    %v482 = vmax.f32 %v480, %v481
    %v483 = vrot.slane %v482, 1
    %v484 = vmax.f32 %v482, %v483
    %v485 = vsel %vm187, %v345, -inf
    %v486 = vrot.slane %v485, 4
    %v487 = vmax.f32 %v485, %v486
    %v488 = vrot.slane %v487, 2
    %v489 = vmax.f32 %v487, %v488
    %v490 = vrot.slane %v489, 1
    %v491 = vmax.f32 %v489, %v490
    %v492 = vsel %vm187, %v386, -inf
    %v493 = vrot.slane %v492, 4
    %v494 = vmax.f32 %v492, %v493
    %v495 = vrot.slane %v494, 2
    %v496 = vmax.f32 %v494, %v495
    %v497 = vrot.slane %v496, 1
    %v498 = vmax.f32 %v496, %v497
    %v499 = vsel %vm187, %v387, -inf
    %v500 = vrot.slane %v499, 4
    %v501 = vmax.f32 %v499, %v500
    %v502 = vrot.slane %v501, 2
    %v503 = vmax.f32 %v501, %v502
    %v504 = vrot.slane %v503, 1
    %v505 = vmax.f32 %v503, %v504
    %v506 = vsel %vm187, %v388, -inf
    %v507 = vrot.slane %v506, 4
    %v508 = vmax.f32 %v506, %v507
    %v509 = vrot.slane %v508, 2
    %v510 = vmax.f32 %v508, %v509
    %v511 = vrot.slane %v510, 1
    %v512 = vmax.f32 %v510, %v511
    %vm513 = vcmask 125952
    %514 = vst.msk [vmem:[#allocation3] sm:$0xf] %vm513, 0.0
    %515 = vst.msk [vmem:[#allocation3 + $0x10] sm:$0xf] %vm513, 0.0
    %vm532 = vcmask 1041409
    %v533 = vsel %vm532, %v414, %v407
    %vm534 = vcmask 1042434
    %v535 = vsel %vm534, %v421, %v533
    %vm536 = vcmask 1043459
    %v537 = vsel %vm536, %v428, %v535
    %vm538 = vcmask 1044484
    %v539 = vsel %vm538, %v435, %v537
    %vm540 = vcmask 1045509
    %v541 = vsel %vm540, %v442, %v539
    %vm542 = vcmask 1046534
    %v543 = vsel %vm542, %v449, %v541
    %vm544 = vcmask 1047559
    %v545 = vsel %vm544, %v456, %v543
    %v546 = vsel %vm532, %v470, %v463
    %v547 = vsel %vm534, %v477, %v546
    %v548 = vsel %vm536, %v484, %v547
    %v549 = vsel %vm538, %v491, %v548
    %v550 = vsel %vm540, %v498, %v549
    %v551 = vsel %vm542, %v505, %v550
    %v552 = vsel %vm544, %v512, %v551
    %555 = vst.msk [vmem:[#allocation3 + $0x4] sm:$0xff] %vm190, %v545
    %556 = vst.msk [vmem:[#allocation3 + $0x14] sm:$0xff] %vm190, %v552
    %v557 = vld [vmem:[#allocation3] sm:$0xff]
    %v558 = vld [vmem:[#allocation3 + $0x8] sm:$0xf]
    %v559 = vld [vmem:[#allocation3 + $0x10] sm:$0xff]
    %v560 = vld [vmem:[#allocation3 + $0x18] sm:$0xf]
    %vm565 = vcmask 1043456
    %v566 = vrot.slane %v557, 4
    %v567 = vrot.slane %v558, 4
    %v568 = vsel %vm565, %v566, %v567
    %v569 = vrot.slane %v559, 4
    %v570 = vrot.slane %v560, 4
    %v571 = vsel %vm565, %v569, %v570
    %v574 = vrot.slane %v557, 2
    %v575 = vrot.slane %v558, 2
    %v576 = vsel %vm87, %v574, %v575
    %v577 = vrot.slane %v559, 2
    %v578 = vrot.slane %v560, 2
    %v579 = vsel %vm87, %v577, %v578
    %580 = vrot.lane.b32.xlu0 %v576, 16
    %v581 = vpop.permute.xlu0 %580
    %582 = vrot.lane.b32.xlu0 %v579, 16
    %v583 = vpop.permute.xlu0 %582
    %586 = vrot.lane.b32.xlu0 %v568, 32
    %v587 = vpop.permute.xlu0 %586
    %588 = vrot.lane.b32.xlu0 %v571, 32
    %v589 = vpop.permute.xlu0 %588
    %v592 = vsel %vm190, %v557, %v581
    %v593 = vsel %vm190, %v559, %v583
    %v594 = vsel %vm255, %v592, %v587
    %v595 = vsel %vm255, %v593, %v589
    %v596 = vpack.c.bf16 %v595, %v594
    %v597 = vld [vmem:[%s7] sm:$0xf]
    %v598 = vld [vmem:[%s7 + $0x4] sm:$0xf]
    %v599 = vld [vmem:[%s7 + $0x8] sm:$0xf]
    %v600 = vld [vmem:[%s7 + $0xc] sm:$0xf]
    %v601 = vld [vmem:[%s7 + $0x10] sm:$0xf]
    %v602 = vld [vmem:[%s7 + $0x14] sm:$0xf]
    %v603 = vld [vmem:[%s8] sm:$0x1]
    %v605 = vperm.slane %v603, 0
    %v613 = vunpack.c.l.b16 %v597
    %v614 = vunpack.c.l.b16 %v598
    %v615 = vunpack.c.l.b16 %v599
    %v616 = vunpack.c.l.b16 %v600
    %v617 = vunpack.c.l.b16 %v601
    %v618 = vunpack.c.l.b16 %v602
    %v619 = vpack.c.b16 %v614, %v613
    %v620 = vpack.c.b16 %v616, %v615
    %v621 = vpack.c.b16 %v618, %v617
    %v626 = vsel %vm272, %v596, 0
    %628 = vmatpush.bf16.msra.mxu0 0
    %629 = vmatpush.bf16.msra.mxu0 0
    %630 = vmatpush.bf16.msra.mxu0 0
    %631 = vmatpush.bf16.msra.mxu0 0
    %632 = vmatpush.bf16.msra.mxu0 0
    %633 = vmatpush.bf16.msra.mxu0 %v621
    %634 = vmatpush.bf16.msra.mxu0 %v620
    %635 = vmatpush.bf16.msra.mxu0 %v619
    %636 = vmatmul.bf16.gmra.mxu0 %v626
    %v637 = vpop.f32.mrf.mxu0
    %v638 = vadd.f32 %v605, %v637
    %v639 = vpop.f32.mrf.mxu0
    %v640 = vadd.f32 %v605, %v639
    %641 = vdwg.mxu0
    %v642 = vmax.f32 %v638, 0.0
    %v643 = vmax.f32 %v640, 0.0
    %644 = vst.msk [vmem:[#allocation4] sm:$0xf] %vm513, 0.0
    %645 = vst.msk [vmem:[#allocation4 + $0x10] sm:$0xf] %vm513, 0.0
    %646 = vst.msk [vmem:[#allocation4 + $0x4] sm:$0xff] %vm190, %v642
    %647 = vst.msk [vmem:[#allocation4 + $0x14] sm:$0xff] %vm190, %v643
    %v648 = vld [vmem:[#allocation4] sm:$0xff]
    %v649 = vld [vmem:[#allocation4 + $0x8] sm:$0xf]
    %v650 = vld [vmem:[#allocation4 + $0x10] sm:$0xff]
    %v651 = vld [vmem:[#allocation4 + $0x18] sm:$0xf]
    %v656 = vrot.slane %v648, 2
    %v657 = vrot.slane %v649, 2
    %v658 = vsel %vm87, %v656, %v657
    %v659 = vrot.slane %v650, 2
    %v660 = vrot.slane %v651, 2
    %v661 = vsel %vm87, %v659, %v660
    %662 = vrot.lane.b32.xlu0 %v658, 16
    %v663 = vpop.permute.xlu0 %662
    %664 = vrot.lane.b32.xlu0 %v661, 16
    %v665 = vpop.permute.xlu0 %664
    %v668 = vrot.slane %v648, 4
    %v669 = vrot.slane %v649, 4
    %v670 = vsel %vm565, %v668, %v669
    %v671 = vrot.slane %v650, 4
    %v672 = vrot.slane %v651, 4
    %v673 = vsel %vm565, %v671, %v672
    %674 = vrot.lane.b32.xlu0 %v670, 32
    %v675 = vpop.permute.xlu0 %674
    %676 = vrot.lane.b32.xlu0 %v673, 32
    %v677 = vpop.permute.xlu0 %676
    %v680 = vsel %vm190, %v648, %v663
    %v681 = vsel %vm190, %v650, %v665
    %v682 = vsel %vm255, %v680, %v675
    %v683 = vsel %vm255, %v681, %v677
    %v684 = vpack.c.bf16 %v683, %v682
    %v685 = vld [vmem:[%s9] sm:$0xf]
    %v686 = vld [vmem:[%s9 + $0x4] sm:$0xf]
    %v687 = vld [vmem:[%s9 + $0x8] sm:$0xf]
    %v688 = vld [vmem:[%s9 + $0xc] sm:$0xf]
    %v689 = vld [vmem:[%s9 + $0x10] sm:$0xf]
    %v690 = vld [vmem:[%s9 + $0x14] sm:$0xf]
    %v691 = vld [vmem:[%s10] sm:$0x1]
    %v693 = vperm.slane %v691, 0
    %v701 = vunpack.c.l.b16 %v685
    %v702 = vunpack.c.l.b16 %v686
    %v703 = vunpack.c.l.b16 %v687
    %v704 = vunpack.c.l.b16 %v688
    %v705 = vunpack.c.l.b16 %v689
    %v706 = vunpack.c.l.b16 %v690
    %v707 = vpack.c.b16 %v702, %v701
    %v708 = vpack.c.b16 %v704, %v703
    %v709 = vpack.c.b16 %v706, %v705
    %v714 = vsel %vm272, %v684, 0
    %716 = vmatpush.bf16.msra.mxu0 0
    %717 = vmatpush.bf16.msra.mxu0 0
    %718 = vmatpush.bf16.msra.mxu0 0
    %719 = vmatpush.bf16.msra.mxu0 0
    %720 = vmatpush.bf16.msra.mxu0 0
    %721 = vmatpush.bf16.msra.mxu0 %v709
    %722 = vmatpush.bf16.msra.mxu0 %v708
    %723 = vmatpush.bf16.msra.mxu0 %v707
    %724 = vmatmul.bf16.gmra.mxu0 %v714
    %v725 = vpop.f32.mrf.mxu0
    %v726 = vadd.f32 %v693, %v725
    %v727 = vpop.f32.mrf.mxu0
    %v728 = vadd.f32 %v693, %v727
    %729 = vdwg.mxu0
    %v730 = vadd.f32 %v726, %v568
    %v731 = vadd.f32 %v728, %v571
    %v732 = vmax.f32 %v730, 0.0
    %v733 = vmax.f32 %v731, 0.0
    %v734 = vsel %vm190, %v732, 0.0
    %v735 = vrot.slane %v734, 4
    %v736 = vadd.f32 %v734, %v735
    %v737 = vrot.slane %v736, 2
    %v738 = vadd.f32 %v736, %v737
    %v739 = vrot.slane %v738, 1
    %v740 = vadd.f32 %v738, %v739
    %v741 = vsel %vm190, %v733, 0.0
    %v742 = vrot.slane %v741, 4
    %v743 = vadd.f32 %v741, %v742
    %v744 = vrot.slane %v743, 2
    %v745 = vadd.f32 %v743, %v744
    %v746 = vrot.slane %v745, 1
    %v747 = vadd.f32 %v745, %v746
    %v748 = vrcp.pop 8.0
    %v749 = vmul.f32 8.0, %v748
    %v750 = vsub.f32 1.0, %v749
    %v751 = vmul.f32 %v748, %v750
    %v752 = vadd.f32 %v748, %v751
    %vm753 = vweird.f32 %v748
    %v754 = vsel %vm753, %v748, %v752
    %v755 = vmul.f32 %v740, %v754
    %v756 = vmul.f32 %v747, %v754
    %v757 = vld [vmem:[%s1] sm:$0x3]
    %v758 = vpack.c.bf16 %v757, %v757
    %v759 = vld [vmem:[%s13] sm:$0x1]
    %v760 = vld [vmem:[%s2] sm:$0x3]
    %v761 = vpack.c.bf16 %v760, %v760
    %v762 = vld [vmem:[%s14] sm:$0x7]
    %vm763 = vcmask 39936
    %v765 = vsel %vm763, %v761, 0
    %vm767 = vcmask 1042432
    %v768 = vsel %vm158, 4294967295, 65535
    %v769 = vsel %vm767, %v768, 0
    %v771 = vand.u32 %v762, %v769
    %773 = vmatpush.bf16.msra.mxu0 0
    %774 = vmatpush.bf16.msra.mxu0 0
    %775 = vmatpush.bf16.msra.mxu0 0
    %776 = vmatpush.bf16.msra.mxu0 0
    %777 = vmatpush.bf16.msra.mxu0 0
    %778 = vmatpush.bf16.msra.mxu0 0
    %779 = vmatpush.bf16.msra.mxu0 0
    %780 = vmatpush.bf16.msra.mxu0 %v771
    %781 = vmatmul.bf16.gmra.mxu0 %v765
    %v782 = vpop.f32.mrf.mxu0
    %v783 = vadd.f32 0.0, %v782
    %v784 = vpop.f32.mrf.mxu0
    %785 = vdwg.mxu0
    %v787 = vsel %vm138, %v758, 0
    %v790 = vsel %vm157, %v759, 0
    %792 = vmatpush.bf16.msra.mxu0 0
    %793 = vmatpush.bf16.msra.mxu0 0
    %794 = vmatpush.bf16.msra.mxu0 0
    %795 = vmatpush.bf16.msra.mxu0 0
    %796 = vmatpush.bf16.msra.mxu0 0
    %797 = vmatpush.bf16.msra.mxu0 0
    %798 = vmatpush.bf16.msra.mxu0 0
    %799 = vmatpush.bf16.msra.mxu0 %v790
    %800 = vmatmul.bf16.gmra.mxu0 %v787
    %v801 = vpop.f32.mrf.mxu0
    %v802 = vadd.f32 %v783, %v801
    %v803 = vpop.f32.mrf.mxu0
    %804 = vdwg.mxu0
    %v805 = vpack.c.bf16 %v371, %v371
    %v806 = vpack.c.bf16 %v372, %v372
    %v807 = vld [vmem:[%s11] sm:$0xf]
    %v808 = vld [vmem:[%s11 + $0x4] sm:$0xf]
    %v811 = vunpack.c.l.b16 %v805
    %v812 = vunpack.c.l.b16 %v806
    %v813 = vsel %vm532, %v812, %v811
    %v814 = vpack.c.b16 %v813, %v813
    %v817 = vunpack.c.l.b16 %v807
    %v818 = vunpack.c.l.b16 %v808
    %v819 = vpack.c.b16 %v818, %v817
    %v822 = vsel %vm190, %v814, 0
    %824 = vmatpush.bf16.msra.mxu0 0
    %825 = vmatpush.bf16.msra.mxu0 0
    %826 = vmatpush.bf16.msra.mxu0 0
    %827 = vmatpush.bf16.msra.mxu0 0
    %828 = vmatpush.bf16.msra.mxu0 0
    %829 = vmatpush.bf16.msra.mxu0 0
    %830 = vmatpush.bf16.msra.mxu0 0
    %831 = vmatpush.bf16.msra.mxu0 %v819
    %832 = vmatmul.bf16.gmra.mxu0 %v822
    %v833 = vpop.f32.mrf.mxu0
    %v834 = vadd.f32 0.0, %v833
    %v835 = vpop.f32.mrf.mxu0
    %836 = vdwg.mxu0
    %v837 = vadd.f32 %v802, %v834
    %v838 = vpack.c.bf16 %v755, %v755
    %v839 = vpack.c.bf16 %v756, %v756
    %v840 = vld [vmem:[%s12] sm:$0xf]
    %v841 = vld [vmem:[%s12 + $0x4] sm:$0xf]
    %v844 = vunpack.c.l.b16 %v838
    %v845 = vunpack.c.l.b16 %v839
    %v846 = vsel %vm532, %v845, %v844
    %v847 = vpack.c.b16 %v846, %v846
    %v850 = vunpack.c.l.b16 %v840
    %v851 = vunpack.c.l.b16 %v841
    %v852 = vpack.c.b16 %v851, %v850
    %v855 = vsel %vm190, %v847, 0
    %857 = vmatpush.bf16.msra.mxu0 0
    %858 = vmatpush.bf16.msra.mxu0 0
    %859 = vmatpush.bf16.msra.mxu0 0
    %860 = vmatpush.bf16.msra.mxu0 0
    %861 = vmatpush.bf16.msra.mxu0 0
    %862 = vmatpush.bf16.msra.mxu0 0
    %863 = vmatpush.bf16.msra.mxu0 0
    %864 = vmatpush.bf16.msra.mxu0 %v852
    %865 = vmatmul.bf16.gmra.mxu0 %v855
    %v866 = vpop.f32.mrf.mxu0
    %v867 = vadd.f32 0.0, %v866
    %v868 = vpop.f32.mrf.mxu0
    %869 = vdwg.mxu0
    %v870 = vadd.f32 %v837, %v867
    %v871 = vld [vmem:[%s15] sm:$0x1]
    %v873 = vperm.slane %v871, 0
    %v875 = vadd.f32 %v870, %v873
    %v876 = vmax.f32 %v875, 0.0
    %v877 = vpack.c.bf16 %v876, %v876
    %v878 = vld [vmem:[%s16] sm:$0xf]
    %v879 = vld [vmem:[%s16 + $0x4] sm:$0xf]
    %v880 = vld [vmem:[%s16 + $0x8] sm:$0xf]
    %v881 = vld [vmem:[%s16 + $0xc] sm:$0xf]
    %v882 = vld [vmem:[%s17] sm:$0x1]
    %v884 = vperm.slane %v882, 0
    %v890 = vunpack.c.l.b16 %v878
    %v891 = vunpack.c.l.b16 %v879
    %v892 = vunpack.c.l.b16 %v880
    %v893 = vunpack.c.l.b16 %v881
    %v894 = vpack.c.b16 %v891, %v890
    %v895 = vpack.c.b16 %v893, %v892
    %v899 = vsel %vm255, %v877, 0
    %901 = vmatpush.bf16.msra.mxu0 0
    %902 = vmatpush.bf16.msra.mxu0 0
    %903 = vmatpush.bf16.msra.mxu0 0
    %904 = vmatpush.bf16.msra.mxu0 0
    %905 = vmatpush.bf16.msra.mxu0 0
    %906 = vmatpush.bf16.msra.mxu0 0
    %907 = vmatpush.bf16.msra.mxu0 %v895
    %908 = vmatpush.bf16.msra.mxu0 %v894
    %909 = vmatmul.bf16.gmra.mxu0 %v899
    %v910 = vpop.f32.mrf.mxu0
    %v911 = vadd.f32 %v884, %v910
    %v912 = vpop.f32.mrf.mxu0
    %913 = vdwg.mxu0
    %vm914 = vcmask 254976
    %915 = vst.msk [vmem:[#allocation5] sm:$0x3] %vm914, %v911
    %v916 = vpack.c.bf16 %v911, %v911
    %v917 = vld [vmem:[%s18] sm:$0xf]
    %v918 = vld [vmem:[%s18 + $0x4] sm:$0xf]
    %v919 = vld [vmem:[%s18 + $0x8] sm:$0xf]
    %v920 = vld [vmem:[%s18 + $0xc] sm:$0xf]
    %v921 = vld [vmem:[%s19] sm:$0x1]
    %v923 = vperm.slane %v921, 0
    %v929 = vunpack.c.l.b16 %v917
    %v930 = vunpack.c.l.b16 %v918
    %v931 = vunpack.c.l.b16 %v919
    %v932 = vunpack.c.l.b16 %v920
    %v933 = vpack.c.b16 %v930, %v929
    %v934 = vpack.c.b16 %v932, %v931
    %v938 = vsel %vm255, %v916, 0
    %940 = vmatpush.bf16.msra.mxu0 0
    %941 = vmatpush.bf16.msra.mxu0 0
    %942 = vmatpush.bf16.msra.mxu0 0
    %943 = vmatpush.bf16.msra.mxu0 0
    %944 = vmatpush.bf16.msra.mxu0 0
    %945 = vmatpush.bf16.msra.mxu0 0
    %946 = vmatpush.bf16.msra.mxu0 %v934
    %947 = vmatpush.bf16.msra.mxu0 %v933
    %948 = vmatmul.bf16.gmra.mxu0 %v938
    %v949 = vpop.f32.mrf.mxu0
    %v950 = vadd.f32 %v923, %v949
    %v951 = vpop.f32.mrf.mxu0
    %952 = vdwg.mxu0
    %vm953 = vcmp.ge.f32.partialorder %v950, 0.0
    %v954 = vmul.f32 %v950, 0.2
    %v955 = vsel %vm953, %v950, %v954
    %v956 = vpack.c.bf16 %v955, %v955
    %v957 = vld [vmem:[%s20] sm:$0xf]
    %v958 = vld [vmem:[%s20 + $0x4] sm:$0xf]
    %v959 = vld [vmem:[%s20 + $0x8] sm:$0xf]
    %v960 = vld [vmem:[%s20 + $0xc] sm:$0xf]
    %v961 = vld [vmem:[%s20 + $0x10] sm:$0xf]
    %v962 = vld [vmem:[%s20 + $0x14] sm:$0xf]
    %v963 = vld [vmem:[%s20 + $0x18] sm:$0xf]
    %v964 = vld [vmem:[%s20 + $0x1c] sm:$0xf]
    %v965 = vld [vmem:[%s20 + $0x20] sm:$0xf]
    %v966 = vld [vmem:[%s20 + $0x24] sm:$0xf]
    %v967 = vld [vmem:[%s20 + $0x28] sm:$0xf]
    %v968 = vld [vmem:[%s20 + $0x2c] sm:$0xf]
    %v969 = vld [vmem:[%s20 + $0x30] sm:$0xf]
    %v970 = vld [vmem:[%s20 + $0x34] sm:$0xf]
    %v971 = vld [vmem:[%s20 + $0x38] sm:$0xf]
    %v972 = vld [vmem:[%s20 + $0x3c] sm:$0xf]
    %v973 = vld [vmem:[%s21] sm:$0x1]
    %v975 = vperm.slane %v973, 0
    %v993 = vunpack.c.l.b16 %v957
    %v994 = vunpack.c.l.b16 %v958
    %v995 = vunpack.c.l.b16 %v959
    %v996 = vunpack.c.l.b16 %v960
    %v997 = vunpack.c.l.b16 %v961
    %v998 = vunpack.c.l.b16 %v962
    %v999 = vunpack.c.l.b16 %v963
    %v1000 = vunpack.c.l.b16 %v964
    %v1001 = vunpack.c.l.b16 %v965
    %v1002 = vunpack.c.l.b16 %v966
    %v1003 = vunpack.c.l.b16 %v967
    %v1004 = vunpack.c.l.b16 %v968
    %v1005 = vunpack.c.l.b16 %v969
    %v1006 = vunpack.c.l.b16 %v970
    %v1007 = vunpack.c.l.b16 %v971
    %v1008 = vunpack.c.l.b16 %v972
    %v1009 = vpack.c.b16 %v994, %v993
    %v1010 = vpack.c.b16 %v996, %v995
    %v1011 = vpack.c.b16 %v998, %v997
    %v1012 = vpack.c.b16 %v1000, %v999
    %v1013 = vpack.c.b16 %v1002, %v1001
    %v1014 = vpack.c.b16 %v1004, %v1003
    %v1015 = vpack.c.b16 %v1006, %v1005
    %v1016 = vpack.c.b16 %v1008, %v1007
    %1025 = vmatpush.bf16.msra.mxu0 %v1016
    %1026 = vmatpush.bf16.msra.mxu0 %v1015
    %1027 = vmatpush.bf16.msra.mxu0 %v1014
    %1028 = vmatpush.bf16.msra.mxu0 %v1013
    %1029 = vmatpush.bf16.msra.mxu0 %v1012
    %1030 = vmatpush.bf16.msra.mxu0 %v1011
    %1031 = vmatpush.bf16.msra.mxu0 %v1010
    %1032 = vmatpush.bf16.msra.mxu0 %v1009
    %1033 = vmatmul.bf16.gmra.mxu0 %v956
    %v1034 = vpop.f32.mrf.mxu0
    %v1035 = vadd.f32 %v975, %v1034
    %v1036 = vpop.f32.mrf.mxu0
    %1037 = vdwg.mxu0
    %1038 = vst [vmem:[%s23] sm:$0x3] %v1035
    // Predicated region
    $region90: #{ms2fnet_tcn_forward.1} parent=1 // pred_check
      _
    $region91: #{ms2fnet_tcn_forward.1} parent=1 // pred_check_branch
      %1040 = sbr.rel (0) target = $region93
    $region92: #{ms2fnet_tcn_forward.1} parent=1 // pred_region
      %1042 = vsyncadd [#allocation6], 0
      %s1044 = sshll.u32 [#allocation5], 4
      %s1045 = int_to_ptr.vmem [resolvable:$true] %s1044
      %s1046 = sshll.u32 %s22, 4
      %s1047 = int_to_ptr.hbm [resolvable:$true] %s1046
      %1049 = dma.vmem_to_hbm [thread:$0]  %s1045, 32, %s1047, [#allocation6]
    $region93: #{ms2fnet_tcn_forward.1} parent=1 // pred_fallthru
      _
    // Predicated region
    $region94: #{ms2fnet_tcn_forward.1} parent=1 // pred_check
      _
    $region95: #{ms2fnet_tcn_forward.1} parent=1 // pred_check_branch
      %1051 = sbr.rel (0) target = $region97
    $region96: #{ms2fnet_tcn_forward.1} parent=1 // pred_region
      _
    $region97: #{ms2fnet_tcn_forward.1} parent=1 // pred_fallthru
      _
    // Predicated region
    $region98: #{ms2fnet_tcn_forward.1} parent=1 // pred_check
      _
    $region99: #{ms2fnet_tcn_forward.1} parent=1 // pred_check_branch
      %1053 = sbr.rel (0) target = $region101
    $region100: #{ms2fnet_tcn_forward.1} parent=1 // pred_region
      %1055 = dma.done [#allocation6], 32
    $region101: #{ms2fnet_tcn_forward.1} parent=1 // pred_fallthru
      _
    // Predicated region
    $region102: #{ms2fnet_tcn_forward.1} parent=1 // pred_check
      _
    $region103: #{ms2fnet_tcn_forward.1} parent=1 // pred_check_branch
      %1057 = sbr.rel (0) target = $region105
    $region104: #{ms2fnet_tcn_forward.1} parent=1 // pred_region
      _
    $region105: #{ms2fnet_tcn_forward.1} parent=1 // pred_fallthru
      _
    %1058 = vsyncpa [#allocation6], 1

</llo_original>
